<compile_context>
chip_gen: v7x
topology: tpu7x:2x2x1
jax: 0.10.0
libtpu: 0.0.40
codegen_flags: <defaults>
</compile_context>

<pallas_src>
import functools
import math

import jax
import jax.numpy as jnp
from jax import lax
from jax.experimental import pallas as pl
from jax.experimental.pallas import tpu as pltpu


# ---- small compat shims so the script runs across jax versions -------------
_CompilerParams = getattr(pltpu, "CompilerParams", None) or getattr(
    pltpu, "TPUCompilerParams")


def _multiple_of(x, m):
    fn = getattr(pl, "multiple_of", None)
    return fn(x, m) if fn is not None else x


def _reciprocal(x, approx=True):
    fn = getattr(pl, "reciprocal", None)
    if fn is None:
        return 1.0 / x
    try:
        return fn(x, approx=approx)
    except TypeError:
        return fn(x)


# ---- kernel -----------------------------------------------------------------
def _rope_mha_kernel(x_ref, wq_ref, wk_ref, wv_ref, wo_ref,
                     bq_ref, bk_ref, bv_ref, bo_ref,
                     cos_ref, sin_ref,
                     out_ref, attnw_ref,
                     krot_ref, vcache_ref, ctx_ref,
                     *, head_dim, heads_per_block, q_tile):
    """One grid step handles (batch b, head block hb, query tile qi)."""
    D = head_dim
    Hb = heads_per_block
    Sq = q_tile
    half = D // 2

    hb = pl.program_id(1)
    qi = pl.program_id(2)
    q_start = _multiple_of(qi * Sq, Sq)

    cos_all = cos_ref[...]                 # (S, Hb*D) f32
    sin_all = sin_ref[...]                 # (S, Hb*D) f32, sign-folded sin

    def swap_halves(t):
        # Per-head half swap inside the packed (rows, Hb*D) layout.
        if Hb == 1 and D % 256 == 0:
            return pltpu.roll(t, shift=half, axis=-1)      # lane-aligned XLU rotate
        parts = []
        for h in range(Hb):
            base = h * D
            parts.append(t[:, base + half:base + D])
            parts.append(t[:, base:base + half])
        return jnp.concatenate(parts, axis=-1)

    def apply_rope(t, cos, sin_signed):
        # rotate_half(t)*sin == half-swap(t)*sin_signed (sign lives in the table).
        return t * cos + swap_halves(t) * sin_signed

    # ---- K/V projection + RoPE(K): once per (batch, head block), reused for qi>0.
    @pl.when(qi == 0)
    def _():
        x_all = x_ref[0]                                               # (S, E) bf16
        k = jnp.dot(x_all, wk_ref[0], preferred_element_type=jnp.float32) + bk_ref[0]
        v = jnp.dot(x_all, wv_ref[0], preferred_element_type=jnp.float32) + bv_ref[0]
        krot_ref[...] = apply_rope(k, cos_all, sin_all).astype(jnp.bfloat16)
        vcache_ref[...] = v.astype(jnp.bfloat16)

    # ---- Q projection + RoPE(Q) for this query tile (scale folded into wq/bq).
    x_q = x_ref[0, pl.ds(q_start, Sq), :]                              # (Sq, E) bf16
    q = jnp.dot(x_q, wq_ref[0], preferred_element_type=jnp.float32) + bq_ref[0]
    cos_q = cos_ref[pl.ds(q_start, Sq), :]
    sin_q = sin_ref[pl.ds(q_start, Sq), :]
    q_rot = apply_rope(q, cos_q, sin_q).astype(jnp.bfloat16)           # (Sq, Hb*D)

    # ---- per-head attention (static unroll over the head block). --------------
    for h in range(Hb):
        sl = slice(h * D, (h + 1) * D)
        qh = q_rot[:, sl]                                              # (Sq, D) bf16
        kh = krot_ref[:, sl]                                           # (S,  D) bf16
        vh = vcache_ref[:, sl]                                         # (S,  D) bf16

        # Contract dim 1 of both operands: no materialized K transpose.
        scores = lax.dot_general(qh, kh, (((1,), (1,)), ((), ())),
                                 preferred_element_type=jnp.float32)   # (Sq, S)

        m = jnp.max(scores, axis=-1, keepdims=True)
        e = jnp.exp(scores - m)
        l = jnp.sum(e, axis=-1, keepdims=True)
        p = e * _reciprocal(l, approx=True)                            # (Sq, S) f32

        attnw_ref[0, h] = p                                            # module semantics

        ctx_ref[:, sl] = jnp.dot(p.astype(jnp.bfloat16), vh,
                                 preferred_element_type=jnp.float32
                                 ).astype(jnp.bfloat16)                # (Sq, D)

    # ---- out-proj contribution of this head block, accumulated in the resident
    #      (1, S, E) output block (written back to HBM once per batch).
    contrib = jnp.dot(ctx_ref[...], wo_ref[0],
                      preferred_element_type=jnp.float32)              # (Sq, E)

    @pl.when(hb == 0)
    def _():
        out_ref[0, pl.ds(q_start, Sq), :] = contrib + bo_ref[...]

    @pl.when(hb > 0)
    def _():
        out_ref[0, pl.ds(q_start, Sq), :] = (
            out_ref[0, pl.ds(q_start, Sq), :] + contrib)


# ---- generation-aware VMEM budget & tiling ----------------------------------
def _vmem_budget_and_targets():
    cap = None
    try:
        info = pltpu.get_tpu_info()
        cap = getattr(info, "vmem_capacity_bytes", None)
    except Exception:
        cap = None
    if not cap:
        cap = 128 << 20
    if cap <= (64 << 20):
        # v7x-class TC: 64 MiB VMEM -> leave headroom, conservative tiles.
        budget = min(int(cap * 0.82), 52 << 20)
        q_target, lane_target = 128, 256
    else:
        # v5e / v6e: 128 MiB VMEM -> larger tiles amortize per-step overhead.
        budget = min(int(cap * 0.85), 104 << 20)
        q_target, lane_target = 512, 512
    return max(budget, 32 << 20), q_target, lane_target


def rope_mha_forward(x, params, num_heads):
    B, S, E = x.shape
    H = num_heads
    D = E // H
    half = D // 2

    budget, q_target, lane_target = _vmem_budget_and_targets()

    def footprint(sq, hb):
        dh = hb * D
        bf, f4 = 2, 4
        blocks = (2 * S * E * bf                    # x (bf16, double-buffered)
                  + 2 * 4 * E * dh * bf             # wq/wk/wv/wo blocks
                  + 2 * (3 * dh + E) * f4           # biases
                  + 2 * 2 * S * dh * f4             # packed cos / sin_signed
                  + 2 * S * E * f4                  # resident out block
                  + 2 * hb * sq * S * f4)           # attn-weights block
        scratch = (2 * S * dh + sq * dh) * bf       # k_rot, v, ctx caches
        interm = (3 * S * dh + 3 * sq * dh) * f4 + 5 * sq * S * f4
        return blocks + scratch + interm

    hb_cands = [hb for hb in range(H, 0, -1)
                if H % hb == 0 and hb * D <= max(lane_target, D)]
    if S <= q_target:
        sq_cands = [S]
    else:
        sq_cands = [t for t in range(q_target, 7, -1) if S % t == 0 and t % 8 == 0]
        if not sq_cands:
            sq_cands = [S]          # TODO(synk): pad/mask path for awkward S
    Hb, Sq = hb_cands[-1], sq_cands[-1]
    done = False
    for hb in hb_cands:
        for sq in sq_cands:
            if footprint(sq, hb) <= budget:
                Hb, Sq, done = hb, sq, True
                break
        if done:
            break

    HB = H // Hb                    # number of head blocks
    QT = S // Sq                    # number of query tiles
    DH = Hb * D                     # packed head-block width

    f32 = jnp.float32
    bf16 = jnp.bfloat16
    scale = 1.0 / math.sqrt(D)

    # torch Linear stores W as (out, in): y = x @ W.T + b.  Pre-transpose, pack
    # Hb heads per block (head-major within a block), cast to bf16.
    def pack_in_proj(w, b, s=1.0):
        wt = (jnp.asarray(w, f32).T * s)                       # (E_in, E_out)
        wp = wt.reshape(E, HB, DH).transpose(1, 0, 2)          # (HB, E, Hb*D)
        bp = (jnp.asarray(b, f32) * s).reshape(HB, 1, DH)
        return wp.astype(bf16), bp

    wq, bq = pack_in_proj(params["wq"], params["bq"], scale)   # 1/sqrt(D) folded in
    wk, bk = pack_in_proj(params["wk"], params["bk"])
    wv, bv = pack_in_proj(params["wv"], params["bv"])
    wo = jnp.asarray(params["wo"], f32).T.reshape(HB, DH, E).astype(bf16)
    bo = jnp.asarray(params["bo"], f32).reshape(1, E)

    # Rotary tables (rotary_dim == head_dim, module default); the sign of
    # rotate_half's first half is folded into sin_signed.  Tiled to the packed
    # head-block width so the RoPE multiplies run on full (., Hb*D) tensors.
    inv_freq = 1.0 / (10000.0 ** (jnp.arange(0, D, 2, dtype=f32) / D))
    t = jnp.arange(S, dtype=f32)
    freqs = jnp.outer(t, inv_freq)                             # (S, D/2)
    emb = jnp.concatenate([freqs, freqs], axis=-1)             # (S, D)
    cos = jnp.cos(emb)
    sin = jnp.sin(emb)
    sin_signed = jnp.concatenate([-sin[:, :half], sin[:, half:]], axis=-1)
    cos_p = jnp.tile(cos, (1, Hb))                             # (S, DH)
    sin_p = jnp.tile(sin_signed, (1, Hb))                      # (S, DH)

    x_bf = x.astype(bf16)

    vmem_limit = int(max(budget, footprint(Sq, Hb) + (8 << 20)))

    out_shapes = (
        jax.ShapeDtypeStruct((B, S, E), f32),         # attn_output
        jax.ShapeDtypeStruct((B, H, S, S), f32),      # attn_weights
    )
    # grid = (B, HB, QT): weight / bias blocks change only with hb, x and the
    # resident output block only with b, attn-weights block every step.
    in_specs = [
        pl.BlockSpec((1, S, E), lambda b, hb, qi: (b, 0, 0)),     # x
        pl.BlockSpec((1, E, DH), lambda b, hb, qi: (hb, 0, 0)),   # wq (packed)
        pl.BlockSpec((1, E, DH), lambda b, hb, qi: (hb, 0, 0)),   # wk
        pl.BlockSpec((1, E, DH), lambda b, hb, qi: (hb, 0, 0)),   # wv
        pl.BlockSpec((1, DH, E), lambda b, hb, qi: (hb, 0, 0)),   # wo
        pl.BlockSpec((1, 1, DH), lambda b, hb, qi: (hb, 0, 0)),   # bq
        pl.BlockSpec((1, 1, DH), lambda b, hb, qi: (hb, 0, 0)),   # bk
        pl.BlockSpec((1, 1, DH), lambda b, hb, qi: (hb, 0, 0)),   # bv
        pl.BlockSpec((1, E), lambda b, hb, qi: (0, 0)),           # bo
        pl.BlockSpec((S, DH), lambda b, hb, qi: (0, 0)),          # cos (packed)
        pl.BlockSpec((S, DH), lambda b, hb, qi: (0, 0)),          # sin_signed
    ]
    out_specs = (
        pl.BlockSpec((1, S, E), lambda b, hb, qi: (b, 0, 0)),         # resident acc
        pl.BlockSpec((1, Hb, Sq, S), lambda b, hb, qi: (b, hb, qi, 0)),
    )

    kernel = functools.partial(_rope_mha_kernel, head_dim=D,
                               heads_per_block=Hb, q_tile=Sq)

    fn = pl.pallas_call(
        kernel,
        out_shape=out_shapes,
        grid_spec=pltpu.PrefetchScalarGridSpec(
            num_scalar_prefetch=0,
            grid=(B, HB, QT),
            in_specs=in_specs,
            out_specs=out_specs,
            scratch_shapes=[
                pltpu.VMEM((S, DH), bf16),      # K_rot cache (per batch/head-block)
                pltpu.VMEM((S, DH), bf16),      # V cache
                pltpu.VMEM((Sq, DH), bf16),     # per-tile merged context
            ],
        ),
        compiler_params=_CompilerParams(
            # hb and qi both touch the resident output block / K-V scratch, so
            # only the batch axis is safe to split across TensorCores.
            dimension_semantics=("parallel", "arbitrary", "arbitrary"),
            vmem_limit_bytes=vmem_limit),
    )
    out, attn_w = fn(x_bf, wq, wk, wv, wo, bq, bk, bv, bo, cos_p, sin_p)
    return out, attn_w


# ---- pure-JAX f32 reference (mirrors the PyTorch module, eval mode) ---------
def rope_mha_reference(x, params, num_heads):
    B, S, E = x.shape
    H = num_heads
    D = E // H

    def linear(t, w, b):
        return t @ w.T + b

    q = linear(x, params["wq"], params["bq"])
    k = linear(x, params["wk"], params["bk"])
    v = linear(x, params["wv"], params["bv"])

    def split(t):
        return t.reshape(B, S, H, D).transpose(0, 2, 1, 3)

    qh, kh, vh = split(q), split(k), split(v)

    inv_freq = 1.0 / (10000.0 ** (jnp.arange(0, D, 2, dtype=jnp.float32) / D))
    t = jnp.arange(S, dtype=jnp.float32)
    emb = jnp.concatenate([jnp.outer(t, inv_freq)] * 2, axis=-1)

    def rot_half(a):
        a1 = a[..., :D // 2]
        a2 = a[..., D // 2:]
        return jnp.concatenate([-a2, a1], axis=-1)

    q_rot = qh * jnp.cos(emb) + rot_half(qh) * jnp.sin(emb)
    k_rot = kh * jnp.cos(emb) + rot_half(kh) * jnp.sin(emb)

    scores = jnp.einsum("bhqd,bhkd->bhqk", q_rot, k_rot) / math.sqrt(D)
    p = jax.nn.softmax(scores, axis=-1)
    ctx = jnp.einsum("bhqk,bhkd->bhqd", p, vh)
    merged = ctx.transpose(0, 2, 1, 3).reshape(B, S, E)
    out = linear(merged, params["wo"], params["bo"])
    return out, p


if __name__ == "__main__":
    key = jax.random.PRNGKey(0)
    B, S, E, H = 2, 8, 32, 4     # batch, seq, embed_dim, num_heads (head_dim = 8)
    keys = jax.random.split(key, 9)
    w_scale = 0.1
    params = {
        "wq": jax.random.normal(keys[0], (E, E), jnp.float32) * w_scale,
        "bq": jax.random.normal(keys[1], (E,), jnp.float32) * w_scale,
        "wk": jax.random.normal(keys[2], (E, E), jnp.float32) * w_scale,
        "bk": jax.random.normal(keys[3], (E,), jnp.float32) * w_scale,
        "wv": jax.random.normal(keys[4], (E, E), jnp.float32) * w_scale,
        "bv": jax.random.normal(keys[5], (E,), jnp.float32) * w_scale,
        "wo": jax.random.normal(keys[6], (E, E), jnp.float32) * w_scale,
        "bo": jax.random.normal(keys[7], (E,), jnp.float32) * w_scale,
    }
    x = jax.random.normal(keys[8], (B, S, E), jnp.float32)

    out, attn_w = rope_mha_forward(x, params, H)
    jax.block_until_ready((out, attn_w))

    ref_out, ref_w = rope_mha_reference(x, params, H)
    assert out.shape == (B, S, E) and attn_w.shape == (B, H, S, S)
    # Tolerances account for bf16 matmul operands (f32 accumulation) and the
    # approx softmax reciprocal.
    assert jnp.allclose(out, ref_out, atol=2e-2, rtol=2e-2)
    assert jnp.allclose(attn_w, ref_w, atol=1e-2, rtol=1e-2)
    print("KERNEL_OK")
</pallas_src>

<mosaic_0001>
module attributes {stable_mosaic.version = 11 : i64} {
  func.func @_rope_mha_kernel(%arg0: i32, %arg1: i32, %arg2: i32, %arg3: memref<1x8x32xbf16, #tpu.memory_space<vmem>>, %arg4: memref<1x32x32xbf16, #tpu.memory_space<vmem>>, %arg5: memref<1x32x32xbf16, #tpu.memory_space<vmem>>, %arg6: memref<1x32x32xbf16, #tpu.memory_space<vmem>>, %arg7: memref<1x32x32xbf16, #tpu.memory_space<vmem>>, %arg8: memref<1x1x32xf32, #tpu.memory_space<vmem>>, %arg9: memref<1x1x32xf32, #tpu.memory_space<vmem>>, %arg10: memref<1x1x32xf32, #tpu.memory_space<vmem>>, %arg11: memref<1x32xf32, #tpu.memory_space<vmem>>, %arg12: memref<8x32xf32, #tpu.memory_space<vmem>>, %arg13: memref<8x32xf32, #tpu.memory_space<vmem>>, %arg14: memref<1x8x32xf32, #tpu.memory_space<vmem>>, %arg15: memref<1x4x8x8xf32, #tpu.memory_space<vmem>>, %arg16: memref<8x32xbf16, #tpu.memory_space<vmem>>, %arg17: memref<8x32xbf16, #tpu.memory_space<vmem>>, %arg18: memref<8x32xbf16, #tpu.memory_space<vmem>>) attributes {dimension_semantics = [#tpu.dimension_semantics<parallel>, #tpu.dimension_semantics<arbitrary>, #tpu.dimension_semantics<arbitrary>], iteration_bounds = array<i64: 2, 1, 1>, scalar_prefetch = 0 : i64, scratch_operands = 3 : i64, tpu.core_type = #tpu.core_type<tc>, window_params = [{transform_indices = @transform_0, window_bounds = array<i64: 1, 8, 32>}, {transform_indices = @transform_1, window_bounds = array<i64: 1, 32, 32>}, {transform_indices = @transform_2, window_bounds = array<i64: 1, 32, 32>}, {transform_indices = @transform_3, window_bounds = array<i64: 1, 32, 32>}, {transform_indices = @transform_4, window_bounds = array<i64: 1, 32, 32>}, {transform_indices = @transform_5, window_bounds = array<i64: 1, 1, 32>}, {transform_indices = @transform_6, window_bounds = array<i64: 1, 1, 32>}, {transform_indices = @transform_7, window_bounds = array<i64: 1, 1, 32>}, {pipeline_mode = #tpu.pipeline_mode<synchronous>, transform_indices = @transform_8, window_bounds = array<i64: 1, 32>}, {pipeline_mode = #tpu.pipeline_mode<synchronous>, transform_indices = @transform_9, window_bounds = array<i64: 8, 32>}, {pipeline_mode = #tpu.pipeline_mode<synchronous>, transform_indices = @transform_10, window_bounds = array<i64: 8, 32>}, {transform_indices = @transform_11, window_bounds = array<i64: 1, 8, 32>}, {transform_indices = @transform_12, window_bounds = array<i64: 1, 4, 8, 8>}]} {
    %c8_i32 = arith.constant 8 : i32
    %0 = arith.muli %arg2, %c8_i32 : i32
    %1 = tpu.assume_multiple %0, 8 : i32
    %c0 = arith.constant 0 : index
    %c0_0 = arith.constant 0 : index
    %2 = vector.load %arg12[%c0, %c0_0] : memref<8x32xf32, #tpu.memory_space<vmem>>, vector<8x32xf32>
    %c0_1 = arith.constant 0 : index
    %c0_2 = arith.constant 0 : index
    %3 = vector.load %arg13[%c0_1, %c0_2] : memref<8x32xf32, #tpu.memory_space<vmem>>, vector<8x32xf32>
    %c0_i32 = arith.constant 0 : i32
    %4 = arith.cmpi eq, %arg2, %c0_i32 : i32
    %5 = arith.extui %4 : i1 to i32
    %c0_i32_3 = arith.constant 0 : i32
    %6 = arith.cmpi ne, %5, %c0_i32_3 : i32
    scf.if %6 {
      %c0_74 = arith.constant 0 : index
      %c0_75 = arith.constant 0 : index
      %c0_76 = arith.constant 0 : index
      %128 = vector.load %arg3[%c0_74, %c0_75, %c0_76] : memref<1x8x32xbf16, #tpu.memory_space<vmem>>, vector<1x8x32xbf16>
      %129 = vector.shape_cast %128 : vector<1x8x32xbf16> to vector<8x32xbf16>
      %c0_77 = arith.constant 0 : index
      %c0_78 = arith.constant 0 : index
      %c0_79 = arith.constant 0 : index
      %130 = vector.load %arg5[%c0_77, %c0_78, %c0_79] : memref<1x32x32xbf16, #tpu.memory_space<vmem>>, vector<1x32x32xbf16>
      %131 = vector.shape_cast %130 : vector<1x32x32xbf16> to vector<32x32xbf16>
      %cst_80 = arith.constant dense<0.000000e+00> : vector<8x32xf32>
      %132 = tpu.matmul %129, %131, %cst_80 {dimension_numbers = #tpu.dot_dimension_numbers<[1], [0], [0], [1], [0, 0, 1, 1], [], []>} : vector<8x32xbf16>, vector<32x32xbf16>, vector<8x32xf32> -> vector<8x32xf32>
      %c0_81 = arith.constant 0 : index
      %c0_82 = arith.constant 0 : index
      %c0_83 = arith.constant 0 : index
      %133 = vector.load %arg9[%c0_81, %c0_82, %c0_83] : memref<1x1x32xf32, #tpu.memory_space<vmem>>, vector<1x1x32xf32>
      %134 = vector.shape_cast %133 : vector<1x1x32xf32> to vector<1x32xf32>
      %135 = vector.broadcast %134 : vector<1x32xf32> to vector<8x32xf32>
      %136 = arith.addf %132, %135 : vector<8x32xf32>
      %c0_84 = arith.constant 0 : index
      %c0_85 = arith.constant 0 : index
      %c0_86 = arith.constant 0 : index
      %137 = vector.load %arg6[%c0_84, %c0_85, %c0_86] : memref<1x32x32xbf16, #tpu.memory_space<vmem>>, vector<1x32x32xbf16>
      %138 = vector.shape_cast %137 : vector<1x32x32xbf16> to vector<32x32xbf16>
      %cst_87 = arith.constant dense<0.000000e+00> : vector<8x32xf32>
      %139 = tpu.matmul %129, %138, %cst_87 {dimension_numbers = #tpu.dot_dimension_numbers<[1], [0], [0], [1], [0, 0, 1, 1], [], []>} : vector<8x32xbf16>, vector<32x32xbf16>, vector<8x32xf32> -> vector<8x32xf32>
      %c0_88 = arith.constant 0 : index
      %c0_89 = arith.constant 0 : index
      %c0_90 = arith.constant 0 : index
      %140 = vector.load %arg10[%c0_88, %c0_89, %c0_90] : memref<1x1x32xf32, #tpu.memory_space<vmem>>, vector<1x1x32xf32>
      %141 = vector.shape_cast %140 : vector<1x1x32xf32> to vector<1x32xf32>
      %142 = vector.broadcast %141 : vector<1x32xf32> to vector<8x32xf32>
      %143 = arith.addf %139, %142 : vector<8x32xf32>
      %144 = arith.mulf %136, %2 : vector<8x32xf32>
      %145 = vector.extract_strided_slice %136 {offsets = [0, 4], sizes = [8, 4], strides = [1, 1]} : vector<8x32xf32> to vector<8x4xf32>
      %146 = vector.extract_strided_slice %136 {offsets = [0, 0], sizes = [8, 4], strides = [1, 1]} : vector<8x32xf32> to vector<8x4xf32>
      %147 = vector.extract_strided_slice %136 {offsets = [0, 12], sizes = [8, 4], strides = [1, 1]} : vector<8x32xf32> to vector<8x4xf32>
      %148 = vector.extract_strided_slice %136 {offsets = [0, 8], sizes = [8, 4], strides = [1, 1]} : vector<8x32xf32> to vector<8x4xf32>
      %149 = vector.extract_strided_slice %136 {offsets = [0, 20], sizes = [8, 4], strides = [1, 1]} : vector<8x32xf32> to vector<8x4xf32>
      %150 = vector.extract_strided_slice %136 {offsets = [0, 16], sizes = [8, 4], strides = [1, 1]} : vector<8x32xf32> to vector<8x4xf32>
      %151 = vector.extract_strided_slice %136 {offsets = [0, 28], sizes = [8, 4], strides = [1, 1]} : vector<8x32xf32> to vector<8x4xf32>
      %152 = vector.extract_strided_slice %136 {offsets = [0, 24], sizes = [8, 4], strides = [1, 1]} : vector<8x32xf32> to vector<8x4xf32>
      %153 = tpu.concatenate %145, %146, %147, %148, %149, %150, %151, %152 in 1 : vector<8x4xf32>, vector<8x4xf32>, vector<8x4xf32>, vector<8x4xf32>, vector<8x4xf32>, vector<8x4xf32>, vector<8x4xf32>, vector<8x4xf32> -> vector<8x32xf32>
      %154 = arith.mulf %153, %3 : vector<8x32xf32>
      %155 = arith.addf %144, %154 : vector<8x32xf32>
      %156 = arith.truncf %155 : vector<8x32xf32> to vector<8x32xbf16>
      %c0_91 = arith.constant 0 : index
      %c0_92 = arith.constant 0 : index
      %157 = vector.load %arg16[%c0_91, %c0_92] : memref<8x32xbf16, #tpu.memory_space<vmem>>, vector<8x32xbf16>
      tpu.vector_store %arg16[%c0_91, %c0_92], %156 {strides = array<i32>} : memref<8x32xbf16, #tpu.memory_space<vmem>>, vector<8x32xbf16>,
      %158 = arith.truncf %143 : vector<8x32xf32> to vector<8x32xbf16>
      %c0_93 = arith.constant 0 : index
      %c0_94 = arith.constant 0 : index
      %159 = vector.load %arg17[%c0_93, %c0_94] : memref<8x32xbf16, #tpu.memory_space<vmem>>, vector<8x32xbf16>
      tpu.vector_store %arg17[%c0_93, %c0_94], %158 {strides = array<i32>} : memref<8x32xbf16, #tpu.memory_space<vmem>>, vector<8x32xbf16>,
    } else {
    }
    %c0_4 = arith.constant 0 : index
    %7 = arith.index_cast %1 : i32 to index
    %c0_5 = arith.constant 0 : index
    %8 = vector.load %arg3[%c0_4, %7, %c0_5] : memref<1x8x32xbf16, #tpu.memory_space<vmem>>, vector<1x8x32xbf16>
    %9 = vector.shape_cast %8 : vector<1x8x32xbf16> to vector<8x32xbf16>
    %c0_6 = arith.constant 0 : index
    %c0_7 = arith.constant 0 : index
    %c0_8 = arith.constant 0 : index
    %10 = vector.load %arg4[%c0_6, %c0_7, %c0_8] : memref<1x32x32xbf16, #tpu.memory_space<vmem>>, vector<1x32x32xbf16>
    %11 = vector.shape_cast %10 : vector<1x32x32xbf16> to vector<32x32xbf16>
    %cst = arith.constant dense<0.000000e+00> : vector<8x32xf32>
    %12 = tpu.matmul %9, %11, %cst {dimension_numbers = #tpu.dot_dimension_numbers<[1], [0], [0], [1], [0, 0, 1, 1], [], []>} : vector<8x32xbf16>, vector<32x32xbf16>, vector<8x32xf32> -> vector<8x32xf32>
    %c0_9 = arith.constant 0 : index
    %c0_10 = arith.constant 0 : index
    %c0_11 = arith.constant 0 : index
    %13 = vector.load %arg8[%c0_9, %c0_10, %c0_11] : memref<1x1x32xf32, #tpu.memory_space<vmem>>, vector<1x1x32xf32>
    %14 = vector.shape_cast %13 : vector<1x1x32xf32> to vector<1x32xf32>
    %15 = vector.broadcast %14 : vector<1x32xf32> to vector<8x32xf32>
    %16 = arith.addf %12, %15 : vector<8x32xf32>
    %17 = arith.index_cast %1 : i32 to index
    %c0_12 = arith.constant 0 : index
    %18 = vector.load %arg12[%17, %c0_12] : memref<8x32xf32, #tpu.memory_space<vmem>>, vector<8x32xf32>
    %19 = arith.index_cast %1 : i32 to index
    %c0_13 = arith.constant 0 : index
    %20 = vector.load %arg13[%19, %c0_13] : memref<8x32xf32, #tpu.memory_space<vmem>>, vector<8x32xf32>
    %21 = arith.mulf %16, %18 : vector<8x32xf32>
    %22 = vector.extract_strided_slice %16 {offsets = [0, 4], sizes = [8, 4], strides = [1, 1]} : vector<8x32xf32> to vector<8x4xf32>
    %23 = vector.extract_strided_slice %16 {offsets = [0, 0], sizes = [8, 4], strides = [1, 1]} : vector<8x32xf32> to vector<8x4xf32>
    %24 = vector.extract_strided_slice %16 {offsets = [0, 12], sizes = [8, 4], strides = [1, 1]} : vector<8x32xf32> to vector<8x4xf32>
    %25 = vector.extract_strided_slice %16 {offsets = [0, 8], sizes = [8, 4], strides = [1, 1]} : vector<8x32xf32> to vector<8x4xf32>
    %26 = vector.extract_strided_slice %16 {offsets = [0, 20], sizes = [8, 4], strides = [1, 1]} : vector<8x32xf32> to vector<8x4xf32>
    %27 = vector.extract_strided_slice %16 {offsets = [0, 16], sizes = [8, 4], strides = [1, 1]} : vector<8x32xf32> to vector<8x4xf32>
    %28 = vector.extract_strided_slice %16 {offsets = [0, 28], sizes = [8, 4], strides = [1, 1]} : vector<8x32xf32> to vector<8x4xf32>
    %29 = vector.extract_strided_slice %16 {offsets = [0, 24], sizes = [8, 4], strides = [1, 1]} : vector<8x32xf32> to vector<8x4xf32>
    %30 = tpu.concatenate %22, %23, %24, %25, %26, %27, %28, %29 in 1 : vector<8x4xf32>, vector<8x4xf32>, vector<8x4xf32>, vector<8x4xf32>, vector<8x4xf32>, vector<8x4xf32>, vector<8x4xf32>, vector<8x4xf32> -> vector<8x32xf32>
    %31 = arith.mulf %30, %20 : vector<8x32xf32>
    %32 = arith.addf %21, %31 : vector<8x32xf32>
    %33 = arith.truncf %32 : vector<8x32xf32> to vector<8x32xbf16>
    %34 = vector.extract_strided_slice %33 {offsets = [0, 0], sizes = [8, 8], strides = [1, 1]} : vector<8x32xbf16> to vector<8x8xbf16>
    %c0_14 = arith.constant 0 : index
    %c0_15 = arith.constant 0 : index
    %35 = vector.load %arg16[%c0_14, %c0_15] : memref<8x32xbf16, #tpu.memory_space<vmem>>, vector<8x8xbf16>
    %c0_16 = arith.constant 0 : index
    %c0_17 = arith.constant 0 : index
    %36 = vector.load %arg17[%c0_16, %c0_17] : memref<8x32xbf16, #tpu.memory_space<vmem>>, vector<8x8xbf16>
    %cst_18 = arith.constant dense<0.000000e+00> : vector<8x8xf32>
    %37 = tpu.matmul %34, %35, %cst_18 {dimension_numbers = #tpu.dot_dimension_numbers<[1], [1], [0], [0], [0, 0, 1, 0], [], []>} : vector<8x8xbf16>, vector<8x8xbf16>, vector<8x8xf32> -> vector<8x8xf32>
    %cst_19 = arith.constant dense<0xFF800000> : vector<8xf32>
    %38 = vector.multi_reduction <maximumf>, %37, %cst_19 [1] : vector<8x8xf32> to vector<8xf32>
    %39 = vector.shape_cast %38 : vector<8xf32> to vector<8x1xf32>
    %40 = vector.broadcast %39 : vector<8x1xf32> to vector<8x8xf32>
    %41 = arith.subf %37, %40 : vector<8x8xf32>
    %42 = math.exp %41 : vector<8x8xf32>
    %cst_20 = arith.constant dense<0.000000e+00> : vector<8xf32>
    %43 = vector.multi_reduction <add>, %42, %cst_20 [1] : vector<8x8xf32> to vector<8xf32>
    %44 = vector.shape_cast %43 : vector<8xf32> to vector<8x1xf32>
    %45 = tpu.reciprocal %44 {approx = true} : vector<8x1xf32> -> vector<8x1xf32>
    %46 = vector.broadcast %45 : vector<8x1xf32> to vector<8x8xf32>
    %47 = arith.mulf %42, %46 : vector<8x8xf32>
    %c0_21 = arith.constant 0 : index
    %c0_22 = arith.constant 0 : index
    %c0_23 = arith.constant 0 : index
    %c0_24 = arith.constant 0 : index
    %48 = vector.load %arg15[%c0_21, %c0_22, %c0_23, %c0_24] : memref<1x4x8x8xf32, #tpu.memory_space<vmem>>, vector<1x1x8x8xf32>
    %49 = vector.shape_cast %48 : vector<1x1x8x8xf32> to vector<8x8xf32>
    %50 = vector.shape_cast %47 : vector<8x8xf32> to vector<1x1x8x8xf32>
    tpu.vector_store %arg15[%c0_21, %c0_22, %c0_23, %c0_24], %50 {strides = array<i32>} : memref<1x4x8x8xf32, #tpu.memory_space<vmem>>, vector<1x1x8x8xf32>,
    %51 = arith.truncf %47 : vector<8x8xf32> to vector<8x8xbf16>
    %cst_25 = arith.constant dense<0.000000e+00> : vector<8x8xf32>
    %52 = tpu.matmul %51, %36, %cst_25 {dimension_numbers = #tpu.dot_dimension_numbers<[1], [0], [0], [1], [0, 0, 1, 1], [], []>} : vector<8x8xbf16>, vector<8x8xbf16>, vector<8x8xf32> -> vector<8x8xf32>
    %53 = arith.truncf %52 : vector<8x8xf32> to vector<8x8xbf16>
    %c0_26 = arith.constant 0 : index
    %c0_27 = arith.constant 0 : index
    %54 = vector.load %arg18[%c0_26, %c0_27] : memref<8x32xbf16, #tpu.memory_space<vmem>>, vector<8x8xbf16>
    tpu.vector_store %arg18[%c0_26, %c0_27], %53 {strides = array<i32>} : memref<8x32xbf16, #tpu.memory_space<vmem>>, vector<8x8xbf16>,
    %55 = vector.extract_strided_slice %33 {offsets = [0, 8], sizes = [8, 8], strides = [1, 1]} : vector<8x32xbf16> to vector<8x8xbf16>
    %c0_28 = arith.constant 0 : index
    %c8 = arith.constant 8 : index
    %56 = vector.load %arg16[%c0_28, %c8] : memref<8x32xbf16, #tpu.memory_space<vmem>>, vector<8x8xbf16>
    %c0_29 = arith.constant 0 : index
    %c8_30 = arith.constant 8 : index
    %57 = vector.load %arg17[%c0_29, %c8_30] : memref<8x32xbf16, #tpu.memory_space<vmem>>, vector<8x8xbf16>
    %cst_31 = arith.constant dense<0.000000e+00> : vector<8x8xf32>
    %58 = tpu.matmul %55, %56, %cst_31 {dimension_numbers = #tpu.dot_dimension_numbers<[1], [1], [0], [0], [0, 0, 1, 0], [], []>} : vector<8x8xbf16>, vector<8x8xbf16>, vector<8x8xf32> -> vector<8x8xf32>
    %cst_32 = arith.constant dense<0xFF800000> : vector<8xf32>
    %59 = vector.multi_reduction <maximumf>, %58, %cst_32 [1] : vector<8x8xf32> to vector<8xf32>
    %60 = vector.shape_cast %59 : vector<8xf32> to vector<8x1xf32>
    %61 = vector.broadcast %60 : vector<8x1xf32> to vector<8x8xf32>
    %62 = arith.subf %58, %61 : vector<8x8xf32>
    %63 = math.exp %62 : vector<8x8xf32>
    %cst_33 = arith.constant dense<0.000000e+00> : vector<8xf32>
    %64 = vector.multi_reduction <add>, %63, %cst_33 [1] : vector<8x8xf32> to vector<8xf32>
    %65 = vector.shape_cast %64 : vector<8xf32> to vector<8x1xf32>
    %66 = tpu.reciprocal %65 {approx = true} : vector<8x1xf32> -> vector<8x1xf32>
    %67 = vector.broadcast %66 : vector<8x1xf32> to vector<8x8xf32>
    %68 = arith.mulf %63, %67 : vector<8x8xf32>
    %c0_34 = arith.constant 0 : index
    %c1 = arith.constant 1 : index
    %c0_35 = arith.constant 0 : index
    %c0_36 = arith.constant 0 : index
    %69 = vector.load %arg15[%c0_34, %c1, %c0_35, %c0_36] : memref<1x4x8x8xf32, #tpu.memory_space<vmem>>, vector<1x1x8x8xf32>
    %70 = vector.shape_cast %69 : vector<1x1x8x8xf32> to vector<8x8xf32>
    %71 = vector.shape_cast %68 : vector<8x8xf32> to vector<1x1x8x8xf32>
    tpu.vector_store %arg15[%c0_34, %c1, %c0_35, %c0_36], %71 {strides = array<i32>} : memref<1x4x8x8xf32, #tpu.memory_space<vmem>>, vector<1x1x8x8xf32>,
    %72 = arith.truncf %68 : vector<8x8xf32> to vector<8x8xbf16>
    %cst_37 = arith.constant dense<0.000000e+00> : vector<8x8xf32>
    %73 = tpu.matmul %72, %57, %cst_37 {dimension_numbers = #tpu.dot_dimension_numbers<[1], [0], [0], [1], [0, 0, 1, 1], [], []>} : vector<8x8xbf16>, vector<8x8xbf16>, vector<8x8xf32> -> vector<8x8xf32>
    %74 = arith.truncf %73 : vector<8x8xf32> to vector<8x8xbf16>
    %c0_38 = arith.constant 0 : index
    %c8_39 = arith.constant 8 : index
    %75 = vector.load %arg18[%c0_38, %c8_39] : memref<8x32xbf16, #tpu.memory_space<vmem>>, vector<8x8xbf16>
    tpu.vector_store %arg18[%c0_38, %c8_39], %74 {strides = array<i32>} : memref<8x32xbf16, #tpu.memory_space<vmem>>, vector<8x8xbf16>,
    %76 = vector.extract_strided_slice %33 {offsets = [0, 16], sizes = [8, 8], strides = [1, 1]} : vector<8x32xbf16> to vector<8x8xbf16>
    %c0_40 = arith.constant 0 : index
    %c16 = arith.constant 16 : index
    %77 = vector.load %arg16[%c0_40, %c16] : memref<8x32xbf16, #tpu.memory_space<vmem>>, vector<8x8xbf16>
    %c0_41 = arith.constant 0 : index
    %c16_42 = arith.constant 16 : index
    %78 = vector.load %arg17[%c0_41, %c16_42] : memref<8x32xbf16, #tpu.memory_space<vmem>>, vector<8x8xbf16>
    %cst_43 = arith.constant dense<0.000000e+00> : vector<8x8xf32>
    %79 = tpu.matmul %76, %77, %cst_43 {dimension_numbers = #tpu.dot_dimension_numbers<[1], [1], [0], [0], [0, 0, 1, 0], [], []>} : vector<8x8xbf16>, vector<8x8xbf16>, vector<8x8xf32> -> vector<8x8xf32>
    %cst_44 = arith.constant dense<0xFF800000> : vector<8xf32>
    %80 = vector.multi_reduction <maximumf>, %79, %cst_44 [1] : vector<8x8xf32> to vector<8xf32>
    %81 = vector.shape_cast %80 : vector<8xf32> to vector<8x1xf32>
    %82 = vector.broadcast %81 : vector<8x1xf32> to vector<8x8xf32>
    %83 = arith.subf %79, %82 : vector<8x8xf32>
    %84 = math.exp %83 : vector<8x8xf32>
    %cst_45 = arith.constant dense<0.000000e+00> : vector<8xf32>
    %85 = vector.multi_reduction <add>, %84, %cst_45 [1] : vector<8x8xf32> to vector<8xf32>
    %86 = vector.shape_cast %85 : vector<8xf32> to vector<8x1xf32>
    %87 = tpu.reciprocal %86 {approx = true} : vector<8x1xf32> -> vector<8x1xf32>
    %88 = vector.broadcast %87 : vector<8x1xf32> to vector<8x8xf32>
    %89 = arith.mulf %84, %88 : vector<8x8xf32>
    %c0_46 = arith.constant 0 : index
    %c2 = arith.constant 2 : index
    %c0_47 = arith.constant 0 : index
    %c0_48 = arith.constant 0 : index
    %90 = vector.load %arg15[%c0_46, %c2, %c0_47, %c0_48] : memref<1x4x8x8xf32, #tpu.memory_space<vmem>>, vector<1x1x8x8xf32>
    %91 = vector.shape_cast %90 : vector<1x1x8x8xf32> to vector<8x8xf32>
    %92 = vector.shape_cast %89 : vector<8x8xf32> to vector<1x1x8x8xf32>
    tpu.vector_store %arg15[%c0_46, %c2, %c0_47, %c0_48], %92 {strides = array<i32>} : memref<1x4x8x8xf32, #tpu.memory_space<vmem>>, vector<1x1x8x8xf32>,
    %93 = arith.truncf %89 : vector<8x8xf32> to vector<8x8xbf16>
    %cst_49 = arith.constant dense<0.000000e+00> : vector<8x8xf32>
    %94 = tpu.matmul %93, %78, %cst_49 {dimension_numbers = #tpu.dot_dimension_numbers<[1], [0], [0], [1], [0, 0, 1, 1], [], []>} : vector<8x8xbf16>, vector<8x8xbf16>, vector<8x8xf32> -> vector<8x8xf32>
    %95 = arith.truncf %94 : vector<8x8xf32> to vector<8x8xbf16>
    %c0_50 = arith.constant 0 : index
    %c16_51 = arith.constant 16 : index
    %96 = vector.load %arg18[%c0_50, %c16_51] : memref<8x32xbf16, #tpu.memory_space<vmem>>, vector<8x8xbf16>
    tpu.vector_store %arg18[%c0_50, %c16_51], %95 {strides = array<i32>} : memref<8x32xbf16, #tpu.memory_space<vmem>>, vector<8x8xbf16>,
    %97 = vector.extract_strided_slice %33 {offsets = [0, 24], sizes = [8, 8], strides = [1, 1]} : vector<8x32xbf16> to vector<8x8xbf16>
    %c0_52 = arith.constant 0 : index
    %c24 = arith.constant 24 : index
    %98 = vector.load %arg16[%c0_52, %c24] : memref<8x32xbf16, #tpu.memory_space<vmem>>, vector<8x8xbf16>
    %c0_53 = arith.constant 0 : index
    %c24_54 = arith.constant 24 : index
    %99 = vector.load %arg17[%c0_53, %c24_54] : memref<8x32xbf16, #tpu.memory_space<vmem>>, vector<8x8xbf16>
    %cst_55 = arith.constant dense<0.000000e+00> : vector<8x8xf32>
    %100 = tpu.matmul %97, %98, %cst_55 {dimension_numbers = #tpu.dot_dimension_numbers<[1], [1], [0], [0], [0, 0, 1, 0], [], []>} : vector<8x8xbf16>, vector<8x8xbf16>, vector<8x8xf32> -> vector<8x8xf32>
    %cst_56 = arith.constant dense<0xFF800000> : vector<8xf32>
    %101 = vector.multi_reduction <maximumf>, %100, %cst_56 [1] : vector<8x8xf32> to vector<8xf32>
    %102 = vector.shape_cast %101 : vector<8xf32> to vector<8x1xf32>
    %103 = vector.broadcast %102 : vector<8x1xf32> to vector<8x8xf32>
    %104 = arith.subf %100, %103 : vector<8x8xf32>
    %105 = math.exp %104 : vector<8x8xf32>
    %cst_57 = arith.constant dense<0.000000e+00> : vector<8xf32>
    %106 = vector.multi_reduction <add>, %105, %cst_57 [1] : vector<8x8xf32> to vector<8xf32>
    %107 = vector.shape_cast %106 : vector<8xf32> to vector<8x1xf32>
    %108 = tpu.reciprocal %107 {approx = true} : vector<8x1xf32> -> vector<8x1xf32>
    %109 = vector.broadcast %108 : vector<8x1xf32> to vector<8x8xf32>
    %110 = arith.mulf %105, %109 : vector<8x8xf32>
    %c0_58 = arith.constant 0 : index
    %c3 = arith.constant 3 : index
    %c0_59 = arith.constant 0 : index
    %c0_60 = arith.constant 0 : index
    %111 = vector.load %arg15[%c0_58, %c3, %c0_59, %c0_60] : memref<1x4x8x8xf32, #tpu.memory_space<vmem>>, vector<1x1x8x8xf32>
    %112 = vector.shape_cast %111 : vector<1x1x8x8xf32> to vector<8x8xf32>
    %113 = vector.shape_cast %110 : vector<8x8xf32> to vector<1x1x8x8xf32>
    tpu.vector_store %arg15[%c0_58, %c3, %c0_59, %c0_60], %113 {strides = array<i32>} : memref<1x4x8x8xf32, #tpu.memory_space<vmem>>, vector<1x1x8x8xf32>,
    %114 = arith.truncf %110 : vector<8x8xf32> to vector<8x8xbf16>
    %cst_61 = arith.constant dense<0.000000e+00> : vector<8x8xf32>
    %115 = tpu.matmul %114, %99, %cst_61 {dimension_numbers = #tpu.dot_dimension_numbers<[1], [0], [0], [1], [0, 0, 1, 1], [], []>} : vector<8x8xbf16>, vector<8x8xbf16>, vector<8x8xf32> -> vector<8x8xf32>
    %116 = arith.truncf %115 : vector<8x8xf32> to vector<8x8xbf16>
    %c0_62 = arith.constant 0 : index
    %c24_63 = arith.constant 24 : index
    %117 = vector.load %arg18[%c0_62, %c24_63] : memref<8x32xbf16, #tpu.memory_space<vmem>>, vector<8x8xbf16>
    tpu.vector_store %arg18[%c0_62, %c24_63], %116 {strides = array<i32>} : memref<8x32xbf16, #tpu.memory_space<vmem>>, vector<8x8xbf16>,
    %c0_64 = arith.constant 0 : index
    %c0_65 = arith.constant 0 : index
    %118 = vector.load %arg18[%c0_64, %c0_65] : memref<8x32xbf16, #tpu.memory_space<vmem>>, vector<8x32xbf16>
    %c0_66 = arith.constant 0 : index
    %c0_67 = arith.constant 0 : index
    %c0_68 = arith.constant 0 : index
    %119 = vector.load %arg7[%c0_66, %c0_67, %c0_68] : memref<1x32x32xbf16, #tpu.memory_space<vmem>>, vector<1x32x32xbf16>
    %120 = vector.shape_cast %119 : vector<1x32x32xbf16> to vector<32x32xbf16>
    %cst_69 = arith.constant dense<0.000000e+00> : vector<8x32xf32>
    %121 = tpu.matmul %118, %120, %cst_69 {dimension_numbers = #tpu.dot_dimension_numbers<[1], [0], [0], [1], [0, 0, 1, 1], [], []>} : vector<8x32xbf16>, vector<32x32xbf16>, vector<8x32xf32> -> vector<8x32xf32>
    %c0_i32_70 = arith.constant 0 : i32
    %122 = arith.cmpi eq, %arg1, %c0_i32_70 : i32
    %123 = arith.extui %122 : i1 to i32
    %c0_i32_71 = arith.constant 0 : i32
    %124 = arith.cmpi ne, %123, %c0_i32_71 : i32
    scf.if %124 {
      %c0_74 = arith.constant 0 : index
      %c0_75 = arith.constant 0 : index
      %128 = vector.load %arg11[%c0_74, %c0_75] : memref<1x32xf32, #tpu.memory_space<vmem>>, vector<1x32xf32>
      %129 = vector.broadcast %128 : vector<1x32xf32> to vector<8x32xf32>
      %130 = arith.addf %121, %129 : vector<8x32xf32>
      %c0_76 = arith.constant 0 : index
      %131 = arith.index_cast %1 : i32 to index
      %c0_77 = arith.constant 0 : index
      %132 = vector.load %arg14[%c0_76, %131, %c0_77] : memref<1x8x32xf32, #tpu.memory_space<vmem>>, vector<1x8x32xf32>
      %133 = vector.shape_cast %132 : vector<1x8x32xf32> to vector<8x32xf32>
      %134 = vector.shape_cast %130 : vector<8x32xf32> to vector<1x8x32xf32>
      tpu.vector_store %arg14[%c0_76, %131, %c0_77], %134 {strides = array<i32>} : memref<1x8x32xf32, #tpu.memory_space<vmem>>, vector<1x8x32xf32>,
    } else {
    }
    %c0_i32_72 = arith.constant 0 : i32
    %125 = arith.cmpi sgt, %arg1, %c0_i32_72 : i32
    %126 = arith.extui %125 : i1 to i32
    %c0_i32_73 = arith.constant 0 : i32
    %127 = arith.cmpi ne, %126, %c0_i32_73 : i32
    scf.if %127 {
      %c0_74 = arith.constant 0 : index
      %128 = arith.index_cast %1 : i32 to index
      %c0_75 = arith.constant 0 : index
      %129 = vector.load %arg14[%c0_74, %128, %c0_75] : memref<1x8x32xf32, #tpu.memory_space<vmem>>, vector<1x8x32xf32>
      %130 = vector.shape_cast %129 : vector<1x8x32xf32> to vector<8x32xf32>
      %131 = arith.addf %130, %121 : vector<8x32xf32>
      %c0_76 = arith.constant 0 : index
      %132 = arith.index_cast %1 : i32 to index
      %c0_77 = arith.constant 0 : index
      %133 = vector.load %arg14[%c0_76, %132, %c0_77] : memref<1x8x32xf32, #tpu.memory_space<vmem>>, vector<1x8x32xf32>
      %134 = vector.shape_cast %133 : vector<1x8x32xf32> to vector<8x32xf32>
      %135 = vector.shape_cast %131 : vector<8x32xf32> to vector<1x8x32xf32>
      tpu.vector_store %arg14[%c0_76, %132, %c0_77], %135 {strides = array<i32>} : memref<1x8x32xf32, #tpu.memory_space<vmem>>, vector<1x8x32xf32>,
    } else {
    }
    return
  }
  func.func @transform_0(%arg0: i32, %arg1: i32, %arg2: i32) -> (i32, i32, i32) {
    %c0_i32 = arith.constant 0 : i32
    %c0_i32_0 = arith.constant 0 : i32
    %c0_i32_1 = arith.constant 0 : i32
    return %arg0, %c0_i32, %c0_i32_0 : i32, i32, i32
  }
  func.func @transform_1(%arg0: i32, %arg1: i32, %arg2: i32) -> (i32, i32, i32) {
    %c0_i32 = arith.constant 0 : i32
    %c0_i32_0 = arith.constant 0 : i32
    %c0_i32_1 = arith.constant 0 : i32
    return %arg1, %c0_i32, %c0_i32_0 : i32, i32, i32
  }
  func.func @transform_2(%arg0: i32, %arg1: i32, %arg2: i32) -> (i32, i32, i32) {
    %c0_i32 = arith.constant 0 : i32
    %c0_i32_0 = arith.constant 0 : i32
    %c0_i32_1 = arith.constant 0 : i32
    return %arg1, %c0_i32, %c0_i32_0 : i32, i32, i32
  }
  func.func @transform_3(%arg0: i32, %arg1: i32, %arg2: i32) -> (i32, i32, i32) {
    %c0_i32 = arith.constant 0 : i32
    %c0_i32_0 = arith.constant 0 : i32
    %c0_i32_1 = arith.constant 0 : i32
    return %arg1, %c0_i32, %c0_i32_0 : i32, i32, i32
  }
  func.func @transform_4(%arg0: i32, %arg1: i32, %arg2: i32) -> (i32, i32, i32) {
    %c0_i32 = arith.constant 0 : i32
    %c0_i32_0 = arith.constant 0 : i32
    %c0_i32_1 = arith.constant 0 : i32
    return %arg1, %c0_i32, %c0_i32_0 : i32, i32, i32
  }
  func.func @transform_5(%arg0: i32, %arg1: i32, %arg2: i32) -> (i32, i32, i32) {
    %c0_i32 = arith.constant 0 : i32
    %c0_i32_0 = arith.constant 0 : i32
    %c0_i32_1 = arith.constant 0 : i32
    return %arg1, %c0_i32, %c0_i32_0 : i32, i32, i32
  }
  func.func @transform_6(%arg0: i32, %arg1: i32, %arg2: i32) -> (i32, i32, i32) {
    %c0_i32 = arith.constant 0 : i32
    %c0_i32_0 = arith.constant 0 : i32
    %c0_i32_1 = arith.constant 0 : i32
    return %arg1, %c0_i32, %c0_i32_0 : i32, i32, i32
  }
  func.func @transform_7(%arg0: i32, %arg1: i32, %arg2: i32) -> (i32, i32, i32) {
    %c0_i32 = arith.constant 0 : i32
    %c0_i32_0 = arith.constant 0 : i32
    %c0_i32_1 = arith.constant 0 : i32
    return %arg1, %c0_i32, %c0_i32_0 : i32, i32, i32
  }
  func.func @transform_8(%arg0: i32, %arg1: i32, %arg2: i32) -> (i32, i32) {
    %c0_i32 = arith.constant 0 : i32
    %c0_i32_0 = arith.constant 0 : i32
    %c0_i32_1 = arith.constant 0 : i32
    return %c0_i32, %c0_i32_0 : i32, i32
  }
  func.func @transform_9(%arg0: i32, %arg1: i32, %arg2: i32) -> (i32, i32) {
    %c0_i32 = arith.constant 0 : i32
    %c0_i32_0 = arith.constant 0 : i32
    %c0_i32_1 = arith.constant 0 : i32
    return %c0_i32, %c0_i32_0 : i32, i32
  }
  func.func @transform_10(%arg0: i32, %arg1: i32, %arg2: i32) -> (i32, i32) {
    %c0_i32 = arith.constant 0 : i32
    %c0_i32_0 = arith.constant 0 : i32
    %c0_i32_1 = arith.constant 0 : i32
    return %c0_i32, %c0_i32_0 : i32, i32
  }
  func.func @transform_11(%arg0: i32, %arg1: i32, %arg2: i32) -> (i32, i32, i32) {
    %c0_i32 = arith.constant 0 : i32
    %c0_i32_0 = arith.constant 0 : i32
    %c0_i32_1 = arith.constant 0 : i32
    return %arg0, %c0_i32, %c0_i32_0 : i32, i32, i32
  }
  func.func @transform_12(%arg0: i32, %arg1: i32, %arg2: i32) -> (i32, i32, i32, i32) {
    %c0_i32 = arith.constant 0 : i32
    %c0_i32_0 = arith.constant 0 : i32
    return %arg0, %arg1, %arg2, %c0_i32 : i32, i32, i32, i32
  }
}

</mosaic_0001>

<llo_original>
// kernel: tpu_custom_call.1
$region0: #{tpu_custom_call.1}
  #allocation0 [shape = 'u32[]', space=smem, size = 0x4, offset = 0x4, fixed_abs, tag = 'smem constant byte address 0x4 - core index']
  #allocation1 [shape = 'u32[144,128]{1,0:T(1,128)}', space=vmem, size = 0x12000, scoped, tag = 'internal scratch']
  #allocation2 [shape = 'bf16[8,32]{1,0:T(8,128)(2,1)}', space=vmem, size = 0x800, scoped, tag = 'scratch operand']
  #allocation3 [shape = 'bf16[8,32]{1,0:T(8,128)(2,1)}', space=vmem, size = 0x800, scoped, tag = 'scratch operand']
  #allocation4 [shape = 'bf16[8,32]{1,0:T(8,128)(2,1)}', space=vmem, size = 0x800, scoped, tag = 'scratch operand']
  %s0 = inlined_call_operand.hbm [shape: bf16[2,8,32], index: 0, kind: input, shape index: {}]
  %s1 = inlined_call_operand.hbm [shape: bf16[1,32,32], index: 1, kind: input, shape index: {}]
  %s2 = inlined_call_operand.hbm [shape: bf16[1,32,32], index: 2, kind: input, shape index: {}]
  %s3 = inlined_call_operand.hbm [shape: bf16[1,32,32], index: 3, kind: input, shape index: {}]
  %s4 = inlined_call_operand.hbm [shape: bf16[1,32,32], index: 4, kind: input, shape index: {}]
  %s5 = inlined_call_operand.hbm [shape: f32[1,1,32], index: 5, kind: input, shape index: {}]
  %s6 = inlined_call_operand.hbm [shape: f32[1,1,32], index: 6, kind: input, shape index: {}]
  %s7 = inlined_call_operand.hbm [shape: f32[1,1,32], index: 7, kind: input, shape index: {}]
  %s8 = inlined_call_operand.hbm [shape: f32[1,32], index: 8, kind: input, shape index: {}]
  %s9 = inlined_call_operand.hbm [shape: f32[8,32], index: 9, kind: input, shape index: {}]
  %s10 = inlined_call_operand.hbm [shape: f32[8,32], index: 10, kind: input, shape index: {}]
  %s11 = inlined_call_operand.hbm [shape: f32[2,8,32], index: 11, kind: output, shape index: {0}]
  %s12 = inlined_call_operand.hbm [shape: f32[2,4,8,8], index: 12, kind: output, shape index: {1}]
  %13 = xla_tuple %s11, %s12
  %s14 = sld [smem:[#allocation0]]
  $region141: #{tpu_custom_call.1} parent=0
    _
  %s16 = ssub.s32 1, %s14
  %s17 = scalar_select 0, %s16, %s14
  $region1: #{tpu_custom_call.1} parent=0
    #allocation5 [shape = 'u8[4096]{0}', space=vmem, size = 0x1000, scoped, tag = 'input window, operand 0']
    #allocation6 [shape = 's32[2]{0}', space=sflag, size = 0x8, scoped, tag = 'scoped memory for tpu_custom_call.1']
    #allocation7 [shape = 's32[2]{0}', space=sflag, size = 0x8, scoped, tag = 'scoped memory for tpu_custom_call.1']
    #allocation8 [shape = 'u8[8192]{0}', space=vmem, size = 0x2000, scoped, tag = 'input window, operand 1, single buffered']
    #allocation9 [shape = 's32[1]{0}', space=sflag, size = 0x4, scoped, tag = 'scoped memory for tpu_custom_call.1']
    #allocation10 [shape = 'u8[8192]{0}', space=vmem, size = 0x2000, scoped, tag = 'input window, operand 2, single buffered']
    #allocation11 [shape = 'u8[8192]{0}', space=vmem, size = 0x2000, scoped, tag = 'input window, operand 3, single buffered']
    #allocation12 [shape = 's32[1]{0}', space=sflag, size = 0x4, scoped, tag = 'scoped memory for tpu_custom_call.1']
    #allocation13 [shape = 'u8[8192]{0}', space=vmem, size = 0x2000, scoped, tag = 'input window, operand 4, single buffered']
    #allocation14 [shape = 'u8[512]{0}', space=vmem, size = 0x400, scoped, tag = 'input window, operand 5, single buffered']
    #allocation15 [shape = 's32[1]{0}', space=sflag, size = 0x4, scoped, tag = 'scoped memory for tpu_custom_call.1']
    #allocation16 [shape = 'u8[512]{0}', space=vmem, size = 0x400, scoped, tag = 'input window, operand 6, single buffered']
    #allocation17 [shape = 'u8[512]{0}', space=vmem, size = 0x400, scoped, tag = 'input window, operand 7, single buffered']
    #allocation18 [shape = 's32[1]{0}', space=sflag, size = 0x4, scoped, tag = 'scoped memory for tpu_custom_call.1']
    #allocation19 [shape = 'u8[512]{0}', space=vmem, size = 0x400, scoped, tag = 'input window, operand 8, single buffered']
    #allocation20 [shape = 'u8[4096]{0}', space=vmem, size = 0x1000, scoped, tag = 'input window, operand 9, single buffered']
    #allocation21 [shape = 's32[1]{0}', space=sflag, size = 0x4, scoped, tag = 'scoped memory for tpu_custom_call.1']
    #allocation22 [shape = 'u8[4096]{0}', space=vmem, size = 0x1000, scoped, tag = 'input window, operand 10, single buffered']
    #allocation23 [shape = 'u8[8192]{0}', space=vmem, size = 0x2000, scoped, tag = 'output window, operand 0']
    #allocation24 [shape = 'u8[32768]{0}', space=vmem, size = 0x8000, scoped, tag = 'output window, operand 1']
    #allocation25 [shape = 's32[2]{0}', space=sflag, size = 0x8, scoped, tag = 'scoped memory for tpu_custom_call.1']
    %18 = vsyncpa [#allocation6], 0
    %s19 = scalar_lea.sflag [#allocation6], 1
    %20 = vsyncpa %s19, 0
    %21 = vsyncpa [#allocation9], 0
    %22 = vsyncpa [#allocation12], 0
    %23 = vsyncpa [#allocation15], 0
    %24 = vsyncpa [#allocation18], 0
    %25 = vsyncpa [#allocation21], 0
    %26 = vsyncpa [#allocation7], 0
    %s27 = scalar_lea.sflag [#allocation7], 1
    %28 = vsyncpa %s27, 0
    %29 = vsyncpa [#allocation25], 0
    %s30 = scalar_lea.sflag [#allocation25], 1
    %31 = vsyncpa %s30, 0
    loop: start=0, step=1, limit=4
    $region2: #{tpu_custom_call.1} parent=1 // loop_pre_header
      _
    $region3: #{tpu_custom_call.1} parent=1 // loop_header
      %s33 = sphi 0, %s37
      %p34 = scmp.ge.s32.totalorder %s33, 4
      %s40 = sphi 0, %s59
      %s41 = sphi 0, %s55
      %s42 = sphi 0, %s51
      %s43 = sphi 0, %s40
      %s44 = sphi 0, %s41
      %s45 = sphi 0, %s42
      %s46 = sphi 0, %s43
      %s47 = sphi 0, %s44
      %s48 = sphi 0, %s45
      %s62 = sphi 0, %s64
      %s65 = sphi 0, %s62
      %s66 = sphi 0, %s65
      %s82 = sphi 0, %s66
      %s88 = sphi 0, %s90
      %s91 = sphi 0, %s88
      %s92 = sphi 0, %s91
      %s108 = sphi 0, %s92
      %s114 = sphi 0, %s116
      %s117 = sphi 0, %s114
      %s118 = sphi 0, %s117
      %s134 = sphi 0, %s118
      %s140 = sphi 0, %s142
      %s143 = sphi 0, %s140
      %s144 = sphi 0, %s143
      %s160 = sphi 0, %s144
      %s166 = sphi 0, %s168
      %s169 = sphi 0, %s166
      %s170 = sphi 0, %s169
      %s186 = sphi 0, %s170
      %s192 = sphi 0, %s194
      %s195 = sphi 0, %s192
      %s196 = sphi 0, %s195
      %s212 = sphi 0, %s196
      %s218 = sphi 0, %s220
      %s221 = sphi 0, %s218
      %s222 = sphi 0, %s221
      %s238 = sphi 0, %s222
      %s244 = sphi 0, %s246
      %s247 = sphi 0, %s244
      %s248 = sphi 0, %s247
      %s264 = sphi 0, %s248
      %s268 = sphi 0, %s268
      %s270 = sphi 0, %s268
      %s271 = sphi 0, %s270
      %s285 = sphi 0, %s271
      %s289 = sphi 0, %s289
      %s291 = sphi 0, %s289
      %s292 = sphi 0, %s291
      %s306 = sphi 0, %s292
      %s310 = sphi 0, %s310
      %s312 = sphi 0, %s310
      %s313 = sphi 0, %s312
      %s327 = sphi 0, %s313
      %s333 = sphi 0, %s335
      %s336 = sphi 0, %s333
      %s337 = sphi 0, %s336
      %s353 = sphi 0, %s337
      %s363 = sphi 0, %s365
      %s366 = sphi 0, %s363
      %s367 = sphi 0, %s366
      %s383 = sphi 0, %s367
    $region4: #{tpu_custom_call.1} parent=1 // loop_header_branch
      %36 = sbr.rel (%p34) target = $region8
    $region5: #{tpu_custom_call.1} parent=1 // loop_body
      %s38 = ssub.s32 %s33, 1
      %s39 = ssub.s32 %s33, 2
      %s49 = sadd.s32 1, %s42
      %p50 = scmp.ge.s32.totalorder %s49, 1
      %s51 = scalar_select %p50, 0, %s49
      %s52 = sadd.s32 1, %s41
      %s53 = scalar_select %p50, %s52, %s41
      %p54 = scmp.ge.s32.totalorder %s53, 1
      %s55 = scalar_select %p54, 0, %s53
      %s56 = sadd.s32 1, %s40
      %s57 = scalar_select %p54, %s56, %s40
      %p58 = scmp.ge.s32.totalorder %s57, 2
      %s59 = scalar_select %p58, 0, %s57
      %s60 = ssub.s32 %s40, %s59
      %p61 = scmp.eq.s32.totalorder %s60, 0
      %s63 = sadd.s32 %s62, 1
      %s64 = scalar_select %p61, %s62, %s63
      %p67 = pneg %p61
      %p68 = scmp.eq.s32.totalorder %s33, 1
      %p69 = por %p67, %p68
      %p70 = scmp.ne.s32.totalorder %s62, %s65
      %p71 = scmp.eq.s32.totalorder %s33, 0
      %p72 = por %p70, %p71
      %p73 = scmp.ne.s32.totalorder %s62, %s65
      %p74 = scmp.eq.s32.totalorder %s38, 1
      %p75 = por %p73, %p74
      %p76 = scmp.ne.s32.totalorder %s65, %s66
      %p77 = scmp.eq.s32.totalorder %s38, 0
      %p78 = por %p76, %p77
      %p79 = scmp.ne.s32.totalorder %s65, %s66
      %p80 = scmp.eq.s32.totalorder %s39, 1
      %p81 = por %p79, %p80
      %p83 = scmp.ne.s32.totalorder %s66, %s82
      %p84 = scmp.eq.s32.totalorder %s39, 0
      %p85 = por %p83, %p84
      %s86 = ssub.s32 %s41, %s55
      %p87 = scmp.eq.s32.totalorder %s86, 0
      %s89 = sadd.s32 %s88, 1
      %s90 = scalar_select %p87, %s88, %s89
      %p93 = pneg %p87
      %p94 = scmp.eq.s32.totalorder %s33, 1
      %p95 = por %p93, %p94
      %p96 = scmp.ne.s32.totalorder %s88, %s91
      %p97 = scmp.eq.s32.totalorder %s33, 0
      %p98 = por %p96, %p97
      %p99 = scmp.ne.s32.totalorder %s88, %s91
      %p100 = scmp.eq.s32.totalorder %s38, 1
      %p101 = por %p99, %p100
      %p102 = scmp.ne.s32.totalorder %s91, %s92
      %p103 = scmp.eq.s32.totalorder %s38, 0
      %p104 = por %p102, %p103
      %p105 = scmp.ne.s32.totalorder %s91, %s92
      %p106 = scmp.eq.s32.totalorder %s39, 1
      %p107 = por %p105, %p106
      %p109 = scmp.ne.s32.totalorder %s92, %s108
      %p110 = scmp.eq.s32.totalorder %s39, 0
      %p111 = por %p109, %p110
      %s112 = ssub.s32 %s41, %s55
      %p113 = scmp.eq.s32.totalorder %s112, 0
      %s115 = sadd.s32 %s114, 1
      %s116 = scalar_select %p113, %s114, %s115
      %p119 = pneg %p113
      %p120 = scmp.eq.s32.totalorder %s33, 1
      %p121 = por %p119, %p120
      %p122 = scmp.ne.s32.totalorder %s114, %s117
      %p123 = scmp.eq.s32.totalorder %s33, 0
      %p124 = por %p122, %p123
      %p125 = scmp.ne.s32.totalorder %s114, %s117
      %p126 = scmp.eq.s32.totalorder %s38, 1
      %p127 = por %p125, %p126
      %p128 = scmp.ne.s32.totalorder %s117, %s118
      %p129 = scmp.eq.s32.totalorder %s38, 0
      %p130 = por %p128, %p129
      %p131 = scmp.ne.s32.totalorder %s117, %s118
      %p132 = scmp.eq.s32.totalorder %s39, 1
      %p133 = por %p131, %p132
      %p135 = scmp.ne.s32.totalorder %s118, %s134
      %p136 = scmp.eq.s32.totalorder %s39, 0
      %p137 = por %p135, %p136
      %s138 = ssub.s32 %s41, %s55
      %p139 = scmp.eq.s32.totalorder %s138, 0
      %s141 = sadd.s32 %s140, 1
      %s142 = scalar_select %p139, %s140, %s141
      %p145 = pneg %p139
      %p146 = scmp.eq.s32.totalorder %s33, 1
      %p147 = por %p145, %p146
      %p148 = scmp.ne.s32.totalorder %s140, %s143
      %p149 = scmp.eq.s32.totalorder %s33, 0
      %p150 = por %p148, %p149
      %p151 = scmp.ne.s32.totalorder %s140, %s143
      %p152 = scmp.eq.s32.totalorder %s38, 1
      %p153 = por %p151, %p152
      %p154 = scmp.ne.s32.totalorder %s143, %s144
      %p155 = scmp.eq.s32.totalorder %s38, 0
      %p156 = por %p154, %p155
      %p157 = scmp.ne.s32.totalorder %s143, %s144
      %p158 = scmp.eq.s32.totalorder %s39, 1
      %p159 = por %p157, %p158
      %p161 = scmp.ne.s32.totalorder %s144, %s160
      %p162 = scmp.eq.s32.totalorder %s39, 0
      %p163 = por %p161, %p162
      %s164 = ssub.s32 %s41, %s55
      %p165 = scmp.eq.s32.totalorder %s164, 0
      %s167 = sadd.s32 %s166, 1
      %s168 = scalar_select %p165, %s166, %s167
      %p171 = pneg %p165
      %p172 = scmp.eq.s32.totalorder %s33, 1
      %p173 = por %p171, %p172
      %p174 = scmp.ne.s32.totalorder %s166, %s169
      %p175 = scmp.eq.s32.totalorder %s33, 0
      %p176 = por %p174, %p175
      %p177 = scmp.ne.s32.totalorder %s166, %s169
      %p178 = scmp.eq.s32.totalorder %s38, 1
      %p179 = por %p177, %p178
      %p180 = scmp.ne.s32.totalorder %s169, %s170
      %p181 = scmp.eq.s32.totalorder %s38, 0
      %p182 = por %p180, %p181
      %p183 = scmp.ne.s32.totalorder %s169, %s170
      %p184 = scmp.eq.s32.totalorder %s39, 1
      %p185 = por %p183, %p184
      %p187 = scmp.ne.s32.totalorder %s170, %s186
      %p188 = scmp.eq.s32.totalorder %s39, 0
      %p189 = por %p187, %p188
      %s190 = ssub.s32 %s41, %s55
      %p191 = scmp.eq.s32.totalorder %s190, 0
      %s193 = sadd.s32 %s192, 1
      %s194 = scalar_select %p191, %s192, %s193
      %p197 = pneg %p191
      %p198 = scmp.eq.s32.totalorder %s33, 1
      %p199 = por %p197, %p198
      %p200 = scmp.ne.s32.totalorder %s192, %s195
      %p201 = scmp.eq.s32.totalorder %s33, 0
      %p202 = por %p200, %p201
      %p203 = scmp.ne.s32.totalorder %s192, %s195
      %p204 = scmp.eq.s32.totalorder %s38, 1
      %p205 = por %p203, %p204
      %p206 = scmp.ne.s32.totalorder %s195, %s196
      %p207 = scmp.eq.s32.totalorder %s38, 0
      %p208 = por %p206, %p207
      %p209 = scmp.ne.s32.totalorder %s195, %s196
      %p210 = scmp.eq.s32.totalorder %s39, 1
      %p211 = por %p209, %p210
      %p213 = scmp.ne.s32.totalorder %s196, %s212
      %p214 = scmp.eq.s32.totalorder %s39, 0
      %p215 = por %p213, %p214
      %s216 = ssub.s32 %s41, %s55
      %p217 = scmp.eq.s32.totalorder %s216, 0
      %s219 = sadd.s32 %s218, 1
      %s220 = scalar_select %p217, %s218, %s219
      %p223 = pneg %p217
      %p224 = scmp.eq.s32.totalorder %s33, 1
      %p225 = por %p223, %p224
      %p226 = scmp.ne.s32.totalorder %s218, %s221
      %p227 = scmp.eq.s32.totalorder %s33, 0
      %p228 = por %p226, %p227
      %p229 = scmp.ne.s32.totalorder %s218, %s221
      %p230 = scmp.eq.s32.totalorder %s38, 1
      %p231 = por %p229, %p230
      %p232 = scmp.ne.s32.totalorder %s221, %s222
      %p233 = scmp.eq.s32.totalorder %s38, 0
      %p234 = por %p232, %p233
      %p235 = scmp.ne.s32.totalorder %s221, %s222
      %p236 = scmp.eq.s32.totalorder %s39, 1
      %p237 = por %p235, %p236
      %p239 = scmp.ne.s32.totalorder %s222, %s238
      %p240 = scmp.eq.s32.totalorder %s39, 0
      %p241 = por %p239, %p240
      %s242 = ssub.s32 %s41, %s55
      %p243 = scmp.eq.s32.totalorder %s242, 0
      %s245 = sadd.s32 %s244, 1
      %s246 = scalar_select %p243, %s244, %s245
      %p249 = pneg %p243
      %p250 = scmp.eq.s32.totalorder %s33, 1
      %p251 = por %p249, %p250
      %p252 = scmp.ne.s32.totalorder %s244, %s247
      %p253 = scmp.eq.s32.totalorder %s33, 0
      %p254 = por %p252, %p253
      %p255 = scmp.ne.s32.totalorder %s244, %s247
      %p256 = scmp.eq.s32.totalorder %s38, 1
      %p257 = por %p255, %p256
      %p258 = scmp.ne.s32.totalorder %s247, %s248
      %p259 = scmp.eq.s32.totalorder %s38, 0
      %p260 = por %p258, %p259
      %p261 = scmp.ne.s32.totalorder %s247, %s248
      %p262 = scmp.eq.s32.totalorder %s39, 1
      %p263 = por %p261, %p262
      %p265 = scmp.ne.s32.totalorder %s248, %s264
      %p266 = scmp.eq.s32.totalorder %s39, 0
      %p267 = por %p265, %p266
      %s269 = sadd.s32 %s268, 1
      %p272 = scmp.eq.s32.totalorder %s33, 1
      %p273 = scmp.ne.s32.totalorder %s268, %s270
      %p274 = scmp.eq.s32.totalorder %s33, 0
      %p275 = por %p273, %p274
      %p276 = scmp.ne.s32.totalorder %s268, %s270
      %p277 = scmp.eq.s32.totalorder %s38, 1
      %p278 = por %p276, %p277
      %p279 = scmp.ne.s32.totalorder %s270, %s271
      %p280 = scmp.eq.s32.totalorder %s38, 0
      %p281 = por %p279, %p280
      %p282 = scmp.ne.s32.totalorder %s270, %s271
      %p283 = scmp.eq.s32.totalorder %s39, 1
      %p284 = por %p282, %p283
      %p286 = scmp.ne.s32.totalorder %s271, %s285
      %p287 = scmp.eq.s32.totalorder %s39, 0
      %p288 = por %p286, %p287
      %s290 = sadd.s32 %s289, 1
      %p293 = scmp.eq.s32.totalorder %s33, 1
      %p294 = scmp.ne.s32.totalorder %s289, %s291
      %p295 = scmp.eq.s32.totalorder %s33, 0
      %p296 = por %p294, %p295
      %p297 = scmp.ne.s32.totalorder %s289, %s291
      %p298 = scmp.eq.s32.totalorder %s38, 1
      %p299 = por %p297, %p298
      %p300 = scmp.ne.s32.totalorder %s291, %s292
      %p301 = scmp.eq.s32.totalorder %s38, 0
      %p302 = por %p300, %p301
      %p303 = scmp.ne.s32.totalorder %s291, %s292
      %p304 = scmp.eq.s32.totalorder %s39, 1
      %p305 = por %p303, %p304
      %p307 = scmp.ne.s32.totalorder %s292, %s306
      %p308 = scmp.eq.s32.totalorder %s39, 0
      %p309 = por %p307, %p308
      %s311 = sadd.s32 %s310, 1
      %p314 = scmp.eq.s32.totalorder %s33, 1
      %p315 = scmp.ne.s32.totalorder %s310, %s312
      %p316 = scmp.eq.s32.totalorder %s33, 0
      %p317 = por %p315, %p316
      %p318 = scmp.ne.s32.totalorder %s310, %s312
      %p319 = scmp.eq.s32.totalorder %s38, 1
      %p320 = por %p318, %p319
      %p321 = scmp.ne.s32.totalorder %s312, %s313
      %p322 = scmp.eq.s32.totalorder %s38, 0
      %p323 = por %p321, %p322
      %p324 = scmp.ne.s32.totalorder %s312, %s313
      %p325 = scmp.eq.s32.totalorder %s39, 1
      %p326 = por %p324, %p325
      %p328 = scmp.ne.s32.totalorder %s313, %s327
      %p329 = scmp.eq.s32.totalorder %s39, 0
      %p330 = por %p328, %p329
      %s331 = ssub.s32 %s40, %s59
      %p332 = scmp.eq.s32.totalorder %s331, 0
      %s334 = sadd.s32 %s333, 1
      %s335 = scalar_select %p332, %s333, %s334
      %p338 = pneg %p332
      %p339 = scmp.eq.s32.totalorder %s33, 1
      %p340 = por %p338, %p339
      %p341 = scmp.ne.s32.totalorder %s333, %s336
      %p342 = scmp.eq.s32.totalorder %s33, 0
      %p343 = por %p341, %p342
      %p344 = scmp.ne.s32.totalorder %s333, %s336
      %p345 = scmp.eq.s32.totalorder %s38, 1
      %p346 = por %p344, %p345
      %p347 = scmp.ne.s32.totalorder %s336, %s337
      %p348 = scmp.eq.s32.totalorder %s38, 0
      %p349 = por %p347, %p348
      %p350 = scmp.ne.s32.totalorder %s336, %s337
      %p351 = scmp.eq.s32.totalorder %s39, 1
      %p352 = por %p350, %p351
      %p354 = scmp.ne.s32.totalorder %s337, %s353
      %p355 = scmp.eq.s32.totalorder %s39, 0
      %p356 = por %p354, %p355
      %s357 = ssub.s32 %s40, %s59
      %s358 = ssub.s32 %s41, %s55
      %s359 = sor.u32 %s357, %s358
      %s360 = ssub.s32 %s42, %s51
      %s361 = sor.u32 %s359, %s360
      %p362 = scmp.eq.s32.totalorder %s361, 0
      %s364 = sadd.s32 %s363, 1
      %s365 = scalar_select %p362, %s363, %s364
      %p368 = pneg %p362
      %p369 = scmp.eq.s32.totalorder %s33, 1
      %p370 = por %p368, %p369
      %p371 = scmp.ne.s32.totalorder %s363, %s366
      %p372 = scmp.eq.s32.totalorder %s33, 0
      %p373 = por %p371, %p372
      %p374 = scmp.ne.s32.totalorder %s363, %s366
      %p375 = scmp.eq.s32.totalorder %s38, 1
      %p376 = por %p374, %p375
      %p377 = scmp.ne.s32.totalorder %s366, %s367
      %p378 = scmp.eq.s32.totalorder %s38, 0
      %p379 = por %p377, %p378
      %p380 = scmp.ne.s32.totalorder %s366, %s367
      %p381 = scmp.eq.s32.totalorder %s39, 1
      %p382 = por %p380, %p381
      %p384 = scmp.ne.s32.totalorder %s367, %s383
      %p385 = scmp.eq.s32.totalorder %s39, 0
      %p386 = por %p384, %p385
      %p387 = scmp.le.s32.totalorder 1, %s33
      %p388 = scmp.lt.s32.totalorder %s33, 3
      %p389 = pnand %p387, %p388
      %p390 = pneg %p389
      // Predicated region
      $region9: #{tpu_custom_call.1} parent=5 // pred_check
        _
      $region10: #{tpu_custom_call.1} parent=5 // pred_check_branch
        %392 = sbr.rel (%p389) target = $region12
      $region11: #{tpu_custom_call.1} parent=5 // pred_region
        %s393 = ssub.s32 %s33, 1
        // Predicated region
        $region13: #{tpu_custom_call.1} parent=11 // pred_check
          %p394 = pneg %p104
        $region14: #{tpu_custom_call.1} parent=11 // pred_check_branch
          %396 = sbr.rel (%p394) target = $region16
        $region15: #{tpu_custom_call.1} parent=11 // pred_region
          %s398 = ssub.s32 256, 256
          %399 = vsyncadd [#allocation9], %s398
          %s400 = smul.addr %s44, 4
          %s401 = smul.addr %s400, 64
          %s402 = scalar_lea.hbm %s1, %s401
          %s403 = sshll.u32 [#allocation8], 4
          %s404 = int_to_ptr.vmem [resolvable:$true] %s403
          %409 = dma.hbm_to_vmem [thread:$0]  %s402, 256, %s404, [#allocation9], 64, 64, 4
        $region16: #{tpu_custom_call.1} parent=11 // pred_fallthru
          _
        // Predicated region
        $region17: #{tpu_custom_call.1} parent=11 // pred_check
          %p410 = pneg %p130
        $region18: #{tpu_custom_call.1} parent=11 // pred_check_branch
          %412 = sbr.rel (%p410) target = $region20
        $region19: #{tpu_custom_call.1} parent=11 // pred_region
          %s414 = ssub.s32 256, 256
          %415 = vsyncadd [#allocation9], %s414
          %s416 = smul.addr %s44, 4
          %s417 = smul.addr %s416, 64
          %s418 = scalar_lea.hbm %s2, %s417
          %s419 = sshll.u32 [#allocation10], 4
          %s420 = int_to_ptr.vmem [resolvable:$true] %s419
          %425 = dma.hbm_to_vmem [thread:$0]  %s418, 256, %s420, [#allocation9], 64, 64, 4
        $region20: #{tpu_custom_call.1} parent=11 // pred_fallthru
          _
        // Predicated region
        $region21: #{tpu_custom_call.1} parent=11 // pred_check
          %p426 = pneg %p156
        $region22: #{tpu_custom_call.1} parent=11 // pred_check_branch
          %428 = sbr.rel (%p426) target = $region24
        $region23: #{tpu_custom_call.1} parent=11 // pred_region
          %s430 = ssub.s32 256, 256
          %431 = vsyncadd [#allocation12], %s430
          %s432 = smul.addr %s44, 4
          %s433 = smul.addr %s432, 64
          %s434 = scalar_lea.hbm %s3, %s433
          %s435 = sshll.u32 [#allocation11], 4
          %s436 = int_to_ptr.vmem [resolvable:$true] %s435
          %441 = dma.hbm_to_vmem [thread:$0]  %s434, 256, %s436, [#allocation12], 64, 64, 4
        $region24: #{tpu_custom_call.1} parent=11 // pred_fallthru
          _
        // Predicated region
        $region25: #{tpu_custom_call.1} parent=11 // pred_check
          %p442 = pneg %p182
        $region26: #{tpu_custom_call.1} parent=11 // pred_check_branch
          %444 = sbr.rel (%p442) target = $region28
        $region27: #{tpu_custom_call.1} parent=11 // pred_region
          %s446 = ssub.s32 256, 256
          %447 = vsyncadd [#allocation12], %s446
          %s448 = smul.addr %s44, 4
          %s449 = smul.addr %s448, 64
          %s450 = scalar_lea.hbm %s4, %s449
          %s451 = sshll.u32 [#allocation13], 4
          %s452 = int_to_ptr.vmem [resolvable:$true] %s451
          %457 = dma.hbm_to_vmem [thread:$0]  %s450, 256, %s452, [#allocation12], 64, 64, 4
        $region28: #{tpu_custom_call.1} parent=11 // pred_fallthru
          _
        // Predicated region
        $region29: #{tpu_custom_call.1} parent=11 // pred_check
          %p458 = pneg %p208
        $region30: #{tpu_custom_call.1} parent=11 // pred_check_branch
          %460 = sbr.rel (%p458) target = $region32
        $region31: #{tpu_custom_call.1} parent=11 // pred_region
          %s462 = ssub.s32 16, 16
          %463 = vsyncadd [#allocation15], %s462
          %s464 = smul.addr %s44, 16
          %s465 = scalar_lea.hbm %s5, %s464
          %s467 = sshll.u32 [#allocation14], 4
          %s468 = int_to_ptr.vmem [resolvable:$true] %s467
          %470 = dma.hbm_to_vmem [thread:$0]  %s465, 16, %s468, [#allocation15]
        $region32: #{tpu_custom_call.1} parent=11 // pred_fallthru
          _
        // Predicated region
        $region33: #{tpu_custom_call.1} parent=11 // pred_check
          %p471 = pneg %p234
        $region34: #{tpu_custom_call.1} parent=11 // pred_check_branch
          %473 = sbr.rel (%p471) target = $region36
        $region35: #{tpu_custom_call.1} parent=11 // pred_region
          %s475 = ssub.s32 16, 16
          %476 = vsyncadd [#allocation15], %s475
          %s477 = smul.addr %s44, 16
          %s478 = scalar_lea.hbm %s6, %s477
          %s480 = sshll.u32 [#allocation16], 4
          %s481 = int_to_ptr.vmem [resolvable:$true] %s480
          %483 = dma.hbm_to_vmem [thread:$0]  %s478, 16, %s481, [#allocation15]
        $region36: #{tpu_custom_call.1} parent=11 // pred_fallthru
          _
        // Predicated region
        $region37: #{tpu_custom_call.1} parent=11 // pred_check
          %p484 = pneg %p260
        $region38: #{tpu_custom_call.1} parent=11 // pred_check_branch
          %486 = sbr.rel (%p484) target = $region40
        $region39: #{tpu_custom_call.1} parent=11 // pred_region
          %s488 = ssub.s32 16, 16
          %489 = vsyncadd [#allocation18], %s488
          %s490 = smul.addr %s44, 16
          %s491 = scalar_lea.hbm %s7, %s490
          %s493 = sshll.u32 [#allocation17], 4
          %s494 = int_to_ptr.vmem [resolvable:$true] %s493
          %496 = dma.hbm_to_vmem [thread:$0]  %s491, 16, %s494, [#allocation18]
        $region40: #{tpu_custom_call.1} parent=11 // pred_fallthru
          _
        // Predicated region
        $region41: #{tpu_custom_call.1} parent=11 // pred_check
          %p497 = pneg %p281
        $region42: #{tpu_custom_call.1} parent=11 // pred_check_branch
          %499 = sbr.rel (%p497) target = $region44
        $region43: #{tpu_custom_call.1} parent=11 // pred_region
          %s501 = ssub.s32 16, 16
          %502 = vsyncadd [#allocation18], %s501
          %s504 = sshll.u32 [#allocation19], 4
          %s505 = int_to_ptr.vmem [resolvable:$true] %s504
          %507 = dma.hbm_to_vmem [thread:$0]  %s8, 16, %s505, [#allocation18]
        $region44: #{tpu_custom_call.1} parent=11 // pred_fallthru
          _
        // Predicated region
        $region45: #{tpu_custom_call.1} parent=11 // pred_check
          %p508 = pneg %p302
        $region46: #{tpu_custom_call.1} parent=11 // pred_check_branch
          %510 = sbr.rel (%p508) target = $region48
        $region47: #{tpu_custom_call.1} parent=11 // pred_region
          %s512 = ssub.s32 128, 128
          %513 = vsyncadd [#allocation21], %s512
          %s515 = sshll.u32 [#allocation20], 4
          %s516 = int_to_ptr.vmem [resolvable:$true] %s515
          %518 = dma.hbm_to_vmem [thread:$0]  %s9, 128, %s516, [#allocation21]
        $region48: #{tpu_custom_call.1} parent=11 // pred_fallthru
          _
        // Predicated region
        $region49: #{tpu_custom_call.1} parent=11 // pred_check
          %p519 = pneg %p323
        $region50: #{tpu_custom_call.1} parent=11 // pred_check_branch
          %521 = sbr.rel (%p519) target = $region52
        $region51: #{tpu_custom_call.1} parent=11 // pred_region
          %s523 = ssub.s32 128, 128
          %524 = vsyncadd [#allocation21], %s523
          %s526 = sshll.u32 [#allocation22], 4
          %s527 = int_to_ptr.vmem [resolvable:$true] %s526
          %529 = dma.hbm_to_vmem [thread:$0]  %s10, 128, %s527, [#allocation21]
        $region52: #{tpu_custom_call.1} parent=11 // pred_fallthru
          _
      $region12: #{tpu_custom_call.1} parent=5 // pred_fallthru
        _
      %p530 = scmp.lt.s32.totalorder %s33, 2
      // Predicated region
      $region53: #{tpu_custom_call.1} parent=5 // pred_check
        %p531 = pneg %p530
      $region54: #{tpu_custom_call.1} parent=5 // pred_check_branch
        %533 = sbr.rel (%p531) target = $region56
      $region55: #{tpu_custom_call.1} parent=5 // pred_region
        // Predicated region
        $region57: #{tpu_custom_call.1} parent=55 // pred_check
          %p534 = pneg %p72
        $region58: #{tpu_custom_call.1} parent=55 // pred_check_branch
          %536 = sbr.rel (%p534) target = $region60
        $region59: #{tpu_custom_call.1} parent=55 // pred_region
          %s537 = sand.u32 %s62, 1
          %s538 = scalar_lea.sflag [#allocation6], %s537
          %s539 = sand.u32 %s62, 1
          %s540 = smul.addr %s539, 4
          %s541 = scalar_lea.vmem [#allocation5], %s540
          %s543 = ssub.s32 64, 64
          %544 = vsyncadd %s538, %s543
          %s545 = smul.addr %s40, 64
          %s546 = scalar_lea.hbm %s0, %s545
          %s548 = sshll.u32 %s541, 4
          %s549 = int_to_ptr.vmem [resolvable:$true] %s548
          %551 = dma.hbm_to_vmem [thread:$0]  %s546, 64, %s549, %s538
        $region60: #{tpu_custom_call.1} parent=55 // pred_fallthru
          _
      $region56: #{tpu_custom_call.1} parent=5 // pred_fallthru
        _
      %p552 = scmp.le.s32.totalorder 1, %s33
      %p553 = scmp.lt.s32.totalorder %s33, 3
      %p554 = pnand %p552, %p553
      %p555 = pneg %p554
      // Predicated region
      $region61: #{tpu_custom_call.1} parent=5 // pred_check
        _
      $region62: #{tpu_custom_call.1} parent=5 // pred_check_branch
        %557 = sbr.rel (%p554) target = $region64
      $region63: #{tpu_custom_call.1} parent=5 // pred_region
        %s558 = ssub.s32 %s33, 1
        %s559 = sand.u32 %s65, 1
        %s560 = scalar_lea.sflag [#allocation6], %s559
        %s561 = sand.u32 %s65, 1
        %s562 = smul.addr %s561, 4
        %s563 = scalar_lea.vmem [#allocation5], %s562
        // Predicated region
        $region65: #{tpu_custom_call.1} parent=63 // pred_check
          %p564 = pneg %p78
        $region66: #{tpu_custom_call.1} parent=63 // pred_check_branch
          %566 = sbr.rel (%p564) target = $region68
        $region67: #{tpu_custom_call.1} parent=63 // pred_region
          %567 = dma.done %s560, 64
        $region68: #{tpu_custom_call.1} parent=63 // pred_fallthru
          _
        // Predicated region
        $region69: #{tpu_custom_call.1} parent=63 // pred_check
          %p568 = pneg %p104
        $region70: #{tpu_custom_call.1} parent=63 // pred_check_branch
          %570 = sbr.rel (%p568) target = $region72
        $region71: #{tpu_custom_call.1} parent=63 // pred_region
          %571 = dma.done [#allocation9], 256
        $region72: #{tpu_custom_call.1} parent=63 // pred_fallthru
          _
        // Predicated region
        $region73: #{tpu_custom_call.1} parent=63 // pred_check
          %p572 = pneg %p130
        $region74: #{tpu_custom_call.1} parent=63 // pred_check_branch
          %574 = sbr.rel (%p572) target = $region76
        $region75: #{tpu_custom_call.1} parent=63 // pred_region
          %575 = dma.done [#allocation9], 256
        $region76: #{tpu_custom_call.1} parent=63 // pred_fallthru
          _
        // Predicated region
        $region77: #{tpu_custom_call.1} parent=63 // pred_check
          %p576 = pneg %p156
        $region78: #{tpu_custom_call.1} parent=63 // pred_check_branch
          %578 = sbr.rel (%p576) target = $region80
        $region79: #{tpu_custom_call.1} parent=63 // pred_region
          %579 = dma.done [#allocation12], 256
        $region80: #{tpu_custom_call.1} parent=63 // pred_fallthru
          _
        // Predicated region
        $region81: #{tpu_custom_call.1} parent=63 // pred_check
          %p580 = pneg %p182
        $region82: #{tpu_custom_call.1} parent=63 // pred_check_branch
          %582 = sbr.rel (%p580) target = $region84
        $region83: #{tpu_custom_call.1} parent=63 // pred_region
          %583 = dma.done [#allocation12], 256
        $region84: #{tpu_custom_call.1} parent=63 // pred_fallthru
          _
        // Predicated region
        $region85: #{tpu_custom_call.1} parent=63 // pred_check
          %p584 = pneg %p208
        $region86: #{tpu_custom_call.1} parent=63 // pred_check_branch
          %586 = sbr.rel (%p584) target = $region88
        $region87: #{tpu_custom_call.1} parent=63 // pred_region
          %587 = dma.done [#allocation15], 16
        $region88: #{tpu_custom_call.1} parent=63 // pred_fallthru
          _
        // Predicated region
        $region89: #{tpu_custom_call.1} parent=63 // pred_check
          %p588 = pneg %p234
        $region90: #{tpu_custom_call.1} parent=63 // pred_check_branch
          %590 = sbr.rel (%p588) target = $region92
        $region91: #{tpu_custom_call.1} parent=63 // pred_region
          %591 = dma.done [#allocation15], 16
        $region92: #{tpu_custom_call.1} parent=63 // pred_fallthru
          _
        // Predicated region
        $region93: #{tpu_custom_call.1} parent=63 // pred_check
          %p592 = pneg %p260
        $region94: #{tpu_custom_call.1} parent=63 // pred_check_branch
          %594 = sbr.rel (%p592) target = $region96
        $region95: #{tpu_custom_call.1} parent=63 // pred_region
          %595 = dma.done [#allocation18], 16
        $region96: #{tpu_custom_call.1} parent=63 // pred_fallthru
          _
        // Predicated region
        $region97: #{tpu_custom_call.1} parent=63 // pred_check
          %p596 = pneg %p281
        $region98: #{tpu_custom_call.1} parent=63 // pred_check_branch
          %598 = sbr.rel (%p596) target = $region100
        $region99: #{tpu_custom_call.1} parent=63 // pred_region
          %599 = dma.done [#allocation18], 16
        $region100: #{tpu_custom_call.1} parent=63 // pred_fallthru
          _
        // Predicated region
        $region101: #{tpu_custom_call.1} parent=63 // pred_check
          %p600 = pneg %p302
        $region102: #{tpu_custom_call.1} parent=63 // pred_check_branch
          %602 = sbr.rel (%p600) target = $region104
        $region103: #{tpu_custom_call.1} parent=63 // pred_region
          %603 = dma.done [#allocation21], 128
        $region104: #{tpu_custom_call.1} parent=63 // pred_fallthru
          _
        // Predicated region
        $region105: #{tpu_custom_call.1} parent=63 // pred_check
          %p604 = pneg %p323
        $region106: #{tpu_custom_call.1} parent=63 // pred_check_branch
          %606 = sbr.rel (%p604) target = $region108
        $region107: #{tpu_custom_call.1} parent=63 // pred_region
          %607 = dma.done [#allocation21], 128
        $region108: #{tpu_custom_call.1} parent=63 // pred_fallthru
          _
        %s608 = sand.u32 %s65, 1
        %s609 = scalar_lea.sflag [#allocation6], %s608
        %s610 = sand.u32 %s65, 1
        %s611 = smul.addr %s610, 4
        %s612 = scalar_lea.vmem [#allocation5], %s611
        %p613 = pneg %p78
        %p614 = pneg %p75
        %p615 = pneg %p104
        %p616 = pneg %p101
        %p617 = pneg %p130
        %p618 = pneg %p127
        %p619 = pneg %p156
        %p620 = pneg %p153
        %p621 = pneg %p182
        %p622 = pneg %p179
        %p623 = pneg %p208
        %p624 = pneg %p205
        %p625 = pneg %p234
        %p626 = pneg %p231
        %p627 = pneg %p260
        %p628 = pneg %p257
        %p629 = pneg %p281
        %p630 = pneg %p278
        %p631 = pneg %p302
        %p632 = pneg %p299
        %p633 = pneg %p323
        %p634 = pneg %p320
        %p635 = pneg %p349
        %p636 = pneg %p346
        %s637 = sand.u32 %s336, 1
        %s638 = scalar_lea.sflag [#allocation7], %s637
        %s639 = sand.u32 %s336, 1
        %s640 = smul.addr %s639, 8
        %s641 = scalar_lea.vmem [#allocation23], %s640
        %p642 = pneg %p379
        %p643 = pneg %p376
        %s644 = sand.u32 %s366, 1
        %s645 = scalar_lea.sflag [#allocation25], %s644
        %s646 = sand.u32 %s366, 1
        %s647 = smul.addr %s646, 32
        %s648 = scalar_lea.vmem [#allocation24], %s647
        %s649 = smul.u32 4, %s44
        %s651 = smul.u32 %s45, 8
        %v652 = vld [vmem:[#allocation20] sm:$0xff]
        %v653 = vld [vmem:[#allocation22] sm:$0xff]
        %p654 = scmp.eq.s32.totalorder %s45, 0
        // Predicated region
        $region109: #{tpu_custom_call.1} parent=63 // pred_check
          %p655 = pneg %p654
        $region110: #{tpu_custom_call.1} parent=63 // pred_check_branch
          %657 = sbr.rel (%p655) target = $region112
        $region111: #{tpu_custom_call.1} parent=63 // pred_region
          %v658 = vld [vmem:[%s563] sm:$0xf]
          %v659 = vld [vmem:[#allocation10] sm:$0xf]
          %v660 = vld [vmem:[#allocation10 + $0x4] sm:$0xf]
          %v661 = vld [vmem:[#allocation10 + $0x8] sm:$0xf]
          %v662 = vld [vmem:[#allocation10 + $0xc] sm:$0xf]
          %v663 = vld [vmem:[#allocation16] sm:$0x1]
          %v665 = vlaneseq
          %v666 = vshrl.u32 %v665, 7
          %v667 = vsub.s32 0, %v666
          %v668 = vrot.slane %v663, %v667
          %v674 = vunpack.c.l.b16 %v659
          %v675 = vunpack.c.l.b16 %v660
          %v676 = vunpack.c.l.b16 %v661
          %v677 = vunpack.c.l.b16 %v662
          %v678 = vpack.c.b16 %v675, %v674
          %v679 = vpack.c.b16 %v677, %v676
          %vm682 = vcmask 261120
          %v684 = vsel %vm682, %v658, 0
          %686 = vmatprep.subr.bf16.mxu0 0
          %687 = vmatpush1.bf16.msra.mxu0 %v678
          %688 = vmatprep.subr.bf16.mxu0 0
          %689 = vmatpush1.bf16.msra.mxu0 %v679
          %690 = vmatprep.subr.bf16.mxu0 0
          %691 = vmatpush1.bf16.msra.mxu0 0
          %692 = vmatprep.subr.bf16.mxu0 0
          %693 = vmatpush1.bf16.msra.mxu0 0
          %694 = vmatprep.subr.bf16.mxu0 0
          %695 = vmatpush1.bf16.msra.mxu0 0
          %696 = vmatprep.subr.bf16.mxu0 0
          %697 = vmatpush1.bf16.msra.mxu0 0
          %698 = vmatprep.subr.bf16.mxu0 0
          %699 = vmatpush1.bf16.msra.mxu0 0
          %700 = vmatprep.subr.bf16.mxu0 0
          %701 = vmatpush1.bf16.msra.mxu0 0
          %702 = vmatprep.subr.bf16.mxu0 0
          %703 = vmatpush1.bf16.msra.mxu0 0
          %704 = vmatprep.subr.bf16.mxu0 0
          %705 = vmatpush1.bf16.msra.mxu0 0
          %706 = vmatprep.subr.bf16.mxu0 0
          %707 = vmatpush1.bf16.msra.mxu0 0
          %708 = vmatprep.subr.bf16.mxu0 0
          %709 = vmatpush1.bf16.msra.mxu0 0
          %710 = vmatprep.subr.bf16.mxu0 0
          %711 = vmatpush1.bf16.msra.mxu0 0
          %712 = vmatprep.subr.bf16.mxu0 0
          %713 = vmatpush1.bf16.msra.mxu0 0
          %714 = vmatprep.subr.bf16.mxu0 0
          %715 = vmatpush1.bf16.msra.mxu0 0
          %716 = vmatprep.subr.bf16.mxu0 0
          %717 = vmatpush1.bf16.msra.mxu0 0
          %718 = vmatprep.mubr.bf16.mxu0 0
          %719 = vmatmul.mubr.bf16.gmra.mrb[0].mxu0 %v684
          %v720 = vpop.f32.mrb[0].mxu0
          %v721 = vadd.f32 %v668, %v720
          %v722 = vpop.f32.mrb[0].mxu0
          %v723 = vpop.f32.mrb[0].mxu0
          %v724 = vpop.f32.mrb[0].mxu0
          %725 = vdwg.mxu0
          %v726 = vld [vmem:[#allocation11] sm:$0xf]
          %v727 = vld [vmem:[#allocation11 + $0x4] sm:$0xf]
          %v728 = vld [vmem:[#allocation11 + $0x8] sm:$0xf]
          %v729 = vld [vmem:[#allocation11 + $0xc] sm:$0xf]
          %v730 = vld [vmem:[#allocation17] sm:$0x1]
          %v732 = vlaneseq
          %v733 = vshrl.u32 %v732, 7
          %v734 = vsub.s32 0, %v733
          %v735 = vrot.slane %v730, %v734
          %v741 = vunpack.c.l.b16 %v726
          %v742 = vunpack.c.l.b16 %v727
          %v743 = vunpack.c.l.b16 %v728
          %v744 = vunpack.c.l.b16 %v729
          %v745 = vpack.c.b16 %v742, %v741
          %v746 = vpack.c.b16 %v744, %v743
          %749 = vmatprep.subr.bf16.mxu0 0
          %750 = vmatpush1.bf16.msra.mxu0 %v745
          %751 = vmatprep.subr.bf16.mxu0 0
          %752 = vmatpush1.bf16.msra.mxu0 %v746
          %753 = vmatprep.subr.bf16.mxu0 0
          %754 = vmatpush1.bf16.msra.mxu0 0
          %755 = vmatprep.subr.bf16.mxu0 0
          %756 = vmatpush1.bf16.msra.mxu0 0
          %757 = vmatprep.subr.bf16.mxu0 0
          %758 = vmatpush1.bf16.msra.mxu0 0
          %759 = vmatprep.subr.bf16.mxu0 0
          %760 = vmatpush1.bf16.msra.mxu0 0
          %761 = vmatprep.subr.bf16.mxu0 0
          %762 = vmatpush1.bf16.msra.mxu0 0
          %763 = vmatprep.subr.bf16.mxu0 0
          %764 = vmatpush1.bf16.msra.mxu0 0
          %765 = vmatprep.subr.bf16.mxu0 0
          %766 = vmatpush1.bf16.msra.mxu0 0
          %767 = vmatprep.subr.bf16.mxu0 0
          %768 = vmatpush1.bf16.msra.mxu0 0
          %769 = vmatprep.subr.bf16.mxu0 0
          %770 = vmatpush1.bf16.msra.mxu0 0
          %771 = vmatprep.subr.bf16.mxu0 0
          %772 = vmatpush1.bf16.msra.mxu0 0
          %773 = vmatprep.subr.bf16.mxu0 0
          %774 = vmatpush1.bf16.msra.mxu0 0
          %775 = vmatprep.subr.bf16.mxu0 0
          %776 = vmatpush1.bf16.msra.mxu0 0
          %777 = vmatprep.subr.bf16.mxu0 0
          %778 = vmatpush1.bf16.msra.mxu0 0
          %779 = vmatprep.subr.bf16.mxu0 0
          %780 = vmatpush1.bf16.msra.mxu0 0
          %781 = vmatprep.mubr.bf16.mxu0 0
          %782 = vmatmul.mubr.bf16.gmra.mrb[0].mxu0 %v684
          %v783 = vpop.f32.mrb[0].mxu0
          %v784 = vadd.f32 %v735, %v783
          %v785 = vpop.f32.mrb[0].mxu0
          %v786 = vpop.f32.mrb[0].mxu0
          %v787 = vpop.f32.mrb[0].mxu0
          %788 = vdwg.mxu0
          %v789 = vmul.f32 %v721, %v652
          %791 = vrot.lane.b32.xlu0 %v721, 124
          %v792 = vpop.permute.xlu0 %791
          %794 = vrot.lane.b32.xlu0 %v721, 4
          %v795 = vpop.permute.xlu0 %794
          %vm797 = vcmask 31744
          %v798 = vsel %vm797, %v792, %v795
          %vm799 = vcmask 64512
          %v800 = vsel %vm799, %v798, %v792
          %vm801 = vcmask 97280
          %v802 = vsel %vm801, %v800, %v795
          %vm803 = vcmask 130048
          %v804 = vsel %vm803, %v802, %v792
          %vm805 = vcmask 162816
          %v806 = vsel %vm805, %v804, %v795
          %vm807 = vcmask 195584
          %v808 = vsel %vm807, %v806, %v792
          %vm809 = vcmask 228352
          %v810 = vsel %vm809, %v808, %v795
          %v811 = vmul.f32 %v810, %v653
          %v812 = vadd.f32 %v789, %v811
          %v813 = vpack.c.bf16 %v812, %v812
          %vm814 = vcmask 257024
          %815 = vst.msk [vmem:[#allocation2] sm:$0xf] %vm814, %v813
          %v816 = vpack.c.bf16 %v784, %v784
          %817 = vst.msk [vmem:[#allocation3] sm:$0xf] %vm814, %v816
        $region112: #{tpu_custom_call.1} parent=63 // pred_fallthru
          _
        %s818 = sshra.s32 %s651, 3
        %s819 = sand.u32 %s651, 7
        %s820 = smul.addr %s818, 4
        %s821 = scalar_lea.vmem %s563, %s820 [#allocation5]
        %v822 = vld [vmem:[%s821] sm:$0xf]
        %v823 = vld [vmem:[#allocation8] sm:$0xf]
        %v824 = vld [vmem:[#allocation8 + $0x4] sm:$0xf]
        %v825 = vld [vmem:[#allocation8 + $0x8] sm:$0xf]
        %v826 = vld [vmem:[#allocation8 + $0xc] sm:$0xf]
        %v827 = vld [vmem:[#allocation14] sm:$0x1]
        %v829 = vlaneseq
        %v830 = vshrl.u32 %v829, 7
        %v831 = vsub.s32 0, %v830
        %v832 = vrot.slane %v827, %v831
        %v838 = vunpack.c.l.b16 %v823
        %v839 = vunpack.c.l.b16 %v824
        %v840 = vunpack.c.l.b16 %v825
        %v841 = vunpack.c.l.b16 %v826
        %v842 = vpack.c.b16 %v839, %v838
        %v843 = vpack.c.b16 %v841, %v840
        %vm846 = vcmask 261120
        %v848 = vsel %vm846, %v822, 0
        %850 = vmatprep.subr.bf16.mxu0 0
        %851 = vmatpush1.bf16.msra.mxu0 %v842
        %852 = vmatprep.subr.bf16.mxu0 0
        %853 = vmatpush1.bf16.msra.mxu0 %v843
        %854 = vmatprep.subr.bf16.mxu0 0
        %855 = vmatpush1.bf16.msra.mxu0 0
        %856 = vmatprep.subr.bf16.mxu0 0
        %857 = vmatpush1.bf16.msra.mxu0 0
        %858 = vmatprep.subr.bf16.mxu0 0
        %859 = vmatpush1.bf16.msra.mxu0 0
        %860 = vmatprep.subr.bf16.mxu0 0
        %861 = vmatpush1.bf16.msra.mxu0 0
        %862 = vmatprep.subr.bf16.mxu0 0
        %863 = vmatpush1.bf16.msra.mxu0 0
        %864 = vmatprep.subr.bf16.mxu0 0
        %865 = vmatpush1.bf16.msra.mxu0 0
        %866 = vmatprep.subr.bf16.mxu0 0
        %867 = vmatpush1.bf16.msra.mxu0 0
        %868 = vmatprep.subr.bf16.mxu0 0
        %869 = vmatpush1.bf16.msra.mxu0 0
        %870 = vmatprep.subr.bf16.mxu0 0
        %871 = vmatpush1.bf16.msra.mxu0 0
        %872 = vmatprep.subr.bf16.mxu0 0
        %873 = vmatpush1.bf16.msra.mxu0 0
        %874 = vmatprep.subr.bf16.mxu0 0
        %875 = vmatpush1.bf16.msra.mxu0 0
        %876 = vmatprep.subr.bf16.mxu0 0
        %877 = vmatpush1.bf16.msra.mxu0 0
        %878 = vmatprep.subr.bf16.mxu0 0
        %879 = vmatpush1.bf16.msra.mxu0 0
        %880 = vmatprep.subr.bf16.mxu0 0
        %881 = vmatpush1.bf16.msra.mxu0 0
        %882 = vmatprep.mubr.bf16.mxu0 0
        %883 = vmatmul.mubr.bf16.gmra.mrb[0].mxu0 %v848
        %v884 = vpop.f32.mrb[0].mxu0
        %v885 = vadd.f32 %v832, %v884
        %v886 = vpop.f32.mrb[0].mxu0
        %v887 = vpop.f32.mrb[0].mxu0
        %v888 = vpop.f32.mrb[0].mxu0
        %889 = vdwg.mxu0
        %s890 = scalar_lea.vmem [#allocation20], %s651
        %v891 = vld [vmem:[%s890] sm:$0xff]
        %s892 = scalar_lea.vmem [#allocation22], %s651
        %v893 = vld [vmem:[%s892] sm:$0xff]
        %v894 = vmul.f32 %v885, %v891
        %896 = vrot.lane.b32.xlu0 %v885, 124
        %v897 = vpop.permute.xlu0 %896
        %899 = vrot.lane.b32.xlu0 %v885, 4
        %v900 = vpop.permute.xlu0 %899
        %vm902 = vcmask 31744
        %v903 = vsel %vm902, %v897, %v900
        %vm904 = vcmask 64512
        %v905 = vsel %vm904, %v903, %v897
        %vm906 = vcmask 97280
        %v907 = vsel %vm906, %v905, %v900
        %vm908 = vcmask 130048
        %v909 = vsel %vm908, %v907, %v897
        %vm910 = vcmask 162816
        %v911 = vsel %vm910, %v909, %v900
        %vm912 = vcmask 195584
        %v913 = vsel %vm912, %v911, %v897
        %vm914 = vcmask 228352
        %v915 = vsel %vm914, %v913, %v900
        %v916 = vmul.f32 %v915, %v893
        %v917 = vadd.f32 %v894, %v916
        %v918 = vpack.c.bf16 %v917, %v917
        %v919 = vld [vmem:[#allocation2] sm:$0xf]
        %v920 = vld [vmem:[#allocation3] sm:$0xf]
        %v922 = vsel %vm904, %v918, 0
        %v925 = vsel %vm904, %v919, 0
        %927 = vmatprep.subr.bf16.mxu0 0
        %928 = vmatpush1.bf16.xpose.msra.mxu0 %v925
        %929 = vmatprep.subr.bf16.mxu0 0
        %930 = vmatpush1.bf16.xpose.msra.mxu0 0
        %931 = vmatprep.subr.bf16.mxu0 0
        %932 = vmatpush1.bf16.xpose.msra.mxu0 0
        %933 = vmatprep.subr.bf16.mxu0 0
        %934 = vmatpush1.bf16.xpose.msra.mxu0 0
        %935 = vmatprep.subr.bf16.mxu0 0
        %936 = vmatpush1.bf16.xpose.msra.mxu0 0
        %937 = vmatprep.subr.bf16.mxu0 0
        %938 = vmatpush1.bf16.xpose.msra.mxu0 0
        %939 = vmatprep.subr.bf16.mxu0 0
        %940 = vmatpush1.bf16.xpose.msra.mxu0 0
        %941 = vmatprep.subr.bf16.mxu0 0
        %942 = vmatpush1.bf16.xpose.msra.mxu0 0
        %943 = vmatprep.subr.bf16.mxu0 0
        %944 = vmatpush1.bf16.xpose.msra.mxu0 0
        %945 = vmatprep.subr.bf16.mxu0 0
        %946 = vmatpush1.bf16.xpose.msra.mxu0 0
        %947 = vmatprep.subr.bf16.mxu0 0
        %948 = vmatpush1.bf16.xpose.msra.mxu0 0
        %949 = vmatprep.subr.bf16.mxu0 0
        %950 = vmatpush1.bf16.xpose.msra.mxu0 0
        %951 = vmatprep.subr.bf16.mxu0 0
        %952 = vmatpush1.bf16.xpose.msra.mxu0 0
        %953 = vmatprep.subr.bf16.mxu0 0
        %954 = vmatpush1.bf16.xpose.msra.mxu0 0
        %955 = vmatprep.subr.bf16.mxu0 0
        %956 = vmatpush1.bf16.xpose.msra.mxu0 0
        %957 = vmatprep.subr.bf16.mxu0 0
        %958 = vmatpush1.bf16.xpose.msra.mxu0 0
        %959 = vmatprep.mubr.bf16.mxu0 0
        %960 = vmatmul.mubr.bf16.gmra.mrb[0].mxu0 %v922
        %v961 = vpop.f32.mrb[0].mxu0
        %v962 = vadd.f32 0.0, %v961
        %v963 = vpop.f32.mrb[0].mxu0
        %v964 = vpop.f32.mrb[0].mxu0
        %v965 = vpop.f32.mrb[0].mxu0
        %966 = vdwg.mxu0
        %v967 = vsel %vm904, %v962, -inf
        %968 = vmax.xlane.f32.xlu0 %v967
        %v969 = vpop.xlane.xlu0 %968
        %v970 = vsub.f32 %v962, %v969
        %v971 = vmul.f32 %v970, 1.442695
        %v972 = vpow.pop %v971
        %v973 = vsel %vm904, %v972, 0.0
        %974 = vadd.xlane.f32.xlu0 %v973
        %v975 = vpop.xlane.xlu0 %974
        %v976 = vrcp.pop %v975
        %v977 = vmul.f32 %v972, %v976
        %978 = vst.msk [vmem:[%s648] sm:$0xff] %vm904, %v977
        %v979 = vpack.c.bf16 %v977, %v977
        %v981 = vsel %vm904, %v979, 0
        %vm983 = vcmask 1043456
        %v985 = vsel %vm983, %v920, 0
        %987 = vmatprep.subr.bf16.mxu0 0
        %988 = vmatpush1.bf16.msra.mxu0 %v985
        %989 = vmatprep.subr.bf16.mxu0 0
        %990 = vmatpush1.bf16.msra.mxu0 0
        %991 = vmatprep.subr.bf16.mxu0 0
        %992 = vmatpush1.bf16.msra.mxu0 0
        %993 = vmatprep.subr.bf16.mxu0 0
        %994 = vmatpush1.bf16.msra.mxu0 0
        %995 = vmatprep.subr.bf16.mxu0 0
        %996 = vmatpush1.bf16.msra.mxu0 0
        %997 = vmatprep.subr.bf16.mxu0 0
        %998 = vmatpush1.bf16.msra.mxu0 0
        %999 = vmatprep.subr.bf16.mxu0 0
        %1000 = vmatpush1.bf16.msra.mxu0 0
        %1001 = vmatprep.subr.bf16.mxu0 0
        %1002 = vmatpush1.bf16.msra.mxu0 0
        %1003 = vmatprep.subr.bf16.mxu0 0
        %1004 = vmatpush1.bf16.msra.mxu0 0
        %1005 = vmatprep.subr.bf16.mxu0 0
        %1006 = vmatpush1.bf16.msra.mxu0 0
        %1007 = vmatprep.subr.bf16.mxu0 0
        %1008 = vmatpush1.bf16.msra.mxu0 0
        %1009 = vmatprep.subr.bf16.mxu0 0
        %1010 = vmatpush1.bf16.msra.mxu0 0
        %1011 = vmatprep.subr.bf16.mxu0 0
        %1012 = vmatpush1.bf16.msra.mxu0 0
        %1013 = vmatprep.subr.bf16.mxu0 0
        %1014 = vmatpush1.bf16.msra.mxu0 0
        %1015 = vmatprep.subr.bf16.mxu0 0
        %1016 = vmatpush1.bf16.msra.mxu0 0
        %1017 = vmatprep.subr.bf16.mxu0 0
        %1018 = vmatpush1.bf16.msra.mxu0 0
        %1019 = vmatprep.mubr.bf16.mxu0 0
        %1020 = vmatmul.mubr.bf16.gmra.mrb[0].mxu0 %v981
        %v1021 = vpop.f32.mrb[0].mxu0
        %v1022 = vadd.f32 0.0, %v1021
        %v1023 = vpop.f32.mrb[0].mxu0
        %v1024 = vpop.f32.mrb[0].mxu0
        %v1025 = vpop.f32.mrb[0].mxu0
        %1026 = vdwg.mxu0
        %v1027 = vpack.c.bf16 %v1022, %v1022
        %vm1028 = vcmask 60416
        %1029 = vst.msk [vmem:[#allocation4] sm:$0xf] %vm1028, %v1027
        %v1030 = vld [vmem:[#allocation2] sm:$0xf]
        %v1031 = vld [vmem:[#allocation3] sm:$0xf]
        %1033 = vrot.lane.b32.xlu0 %v918, 120
        %v1034 = vpop.permute.xlu0 %1033
        %v1036 = vunpack.c.l.b16 %v1030
        %v1037 = vpack.c.b16 %v1036, %v1036
        %1038 = vrot.lane.b32.xlu0 %v1037, 120
        %v1039 = vpop.permute.xlu0 %1038
        %v1041 = vsel %vm904, %v1034, 0
        %v1044 = vsel %vm904, %v1039, 0
        %1046 = vmatprep.subr.bf16.mxu0 0
        %1047 = vmatpush1.bf16.xpose.msra.mxu0 %v1044
        %1048 = vmatprep.subr.bf16.mxu0 0
        %1049 = vmatpush1.bf16.xpose.msra.mxu0 0
        %1050 = vmatprep.subr.bf16.mxu0 0
        %1051 = vmatpush1.bf16.xpose.msra.mxu0 0
        %1052 = vmatprep.subr.bf16.mxu0 0
        %1053 = vmatpush1.bf16.xpose.msra.mxu0 0
        %1054 = vmatprep.subr.bf16.mxu0 0
        %1055 = vmatpush1.bf16.xpose.msra.mxu0 0
        %1056 = vmatprep.subr.bf16.mxu0 0
        %1057 = vmatpush1.bf16.xpose.msra.mxu0 0
        %1058 = vmatprep.subr.bf16.mxu0 0
        %1059 = vmatpush1.bf16.xpose.msra.mxu0 0
        %1060 = vmatprep.subr.bf16.mxu0 0
        %1061 = vmatpush1.bf16.xpose.msra.mxu0 0
        %1062 = vmatprep.subr.bf16.mxu0 0
        %1063 = vmatpush1.bf16.xpose.msra.mxu0 0
        %1064 = vmatprep.subr.bf16.mxu0 0
        %1065 = vmatpush1.bf16.xpose.msra.mxu0 0
        %1066 = vmatprep.subr.bf16.mxu0 0
        %1067 = vmatpush1.bf16.xpose.msra.mxu0 0
        %1068 = vmatprep.subr.bf16.mxu0 0
        %1069 = vmatpush1.bf16.xpose.msra.mxu0 0
        %1070 = vmatprep.subr.bf16.mxu0 0
        %1071 = vmatpush1.bf16.xpose.msra.mxu0 0
        %1072 = vmatprep.subr.bf16.mxu0 0
        %1073 = vmatpush1.bf16.xpose.msra.mxu0 0
        %1074 = vmatprep.subr.bf16.mxu0 0
        %1075 = vmatpush1.bf16.xpose.msra.mxu0 0
        %1076 = vmatprep.subr.bf16.mxu0 0
        %1077 = vmatpush1.bf16.xpose.msra.mxu0 0
        %1078 = vmatprep.mubr.bf16.mxu0 0
        %1079 = vmatmul.mubr.bf16.gmra.mrb[0].mxu0 %v1041
        %v1080 = vpop.f32.mrb[0].mxu0
        %v1081 = vadd.f32 0.0, %v1080
        %v1082 = vpop.f32.mrb[0].mxu0
        %v1083 = vpop.f32.mrb[0].mxu0
        %v1084 = vpop.f32.mrb[0].mxu0
        %1085 = vdwg.mxu0
        %v1086 = vsel %vm904, %v1081, -inf
        %1087 = vmax.xlane.f32.xlu0 %v1086
        %v1088 = vpop.xlane.xlu0 %1087
        %v1089 = vsub.f32 %v1081, %v1088
        %v1090 = vmul.f32 %v1089, 1.442695
        %v1091 = vpow.pop %v1090
        %v1092 = vsel %vm904, %v1091, 0.0
        %1093 = vadd.xlane.f32.xlu0 %v1092
        %v1094 = vpop.xlane.xlu0 %1093
        %v1095 = vrcp.pop %v1094
        %v1096 = vmul.f32 %v1091, %v1095
        %s1097 = scalar_lea.vmem %s648, 8 [#allocation24]
        %1098 = vst.msk [vmem:[%s1097] sm:$0xff] %vm904, %v1096
        %v1099 = vpack.c.bf16 %v1096, %v1096
        %v1101 = vunpack.c.l.b16 %v1031
        %v1102 = vpack.c.b16 %v1101, %v1101
        %1103 = vrot.lane.b32.xlu0 %v1102, 120
        %v1104 = vpop.permute.xlu0 %1103
        %v1106 = vsel %vm904, %v1099, 0
        %v1109 = vsel %vm983, %v1104, 0
        %1111 = vmatprep.subr.bf16.mxu0 0
        %1112 = vmatpush1.bf16.msra.mxu0 %v1109
        %1113 = vmatprep.subr.bf16.mxu0 0
        %1114 = vmatpush1.bf16.msra.mxu0 0
        %1115 = vmatprep.subr.bf16.mxu0 0
        %1116 = vmatpush1.bf16.msra.mxu0 0
        %1117 = vmatprep.subr.bf16.mxu0 0
        %1118 = vmatpush1.bf16.msra.mxu0 0
        %1119 = vmatprep.subr.bf16.mxu0 0
        %1120 = vmatpush1.bf16.msra.mxu0 0
        %1121 = vmatprep.subr.bf16.mxu0 0
        %1122 = vmatpush1.bf16.msra.mxu0 0
        %1123 = vmatprep.subr.bf16.mxu0 0
        %1124 = vmatpush1.bf16.msra.mxu0 0
        %1125 = vmatprep.subr.bf16.mxu0 0
        %1126 = vmatpush1.bf16.msra.mxu0 0
        %1127 = vmatprep.subr.bf16.mxu0 0
        %1128 = vmatpush1.bf16.msra.mxu0 0
        %1129 = vmatprep.subr.bf16.mxu0 0
        %1130 = vmatpush1.bf16.msra.mxu0 0
        %1131 = vmatprep.subr.bf16.mxu0 0
        %1132 = vmatpush1.bf16.msra.mxu0 0
        %1133 = vmatprep.subr.bf16.mxu0 0
        %1134 = vmatpush1.bf16.msra.mxu0 0
        %1135 = vmatprep.subr.bf16.mxu0 0
        %1136 = vmatpush1.bf16.msra.mxu0 0
        %1137 = vmatprep.subr.bf16.mxu0 0
        %1138 = vmatpush1.bf16.msra.mxu0 0
        %1139 = vmatprep.subr.bf16.mxu0 0
        %1140 = vmatpush1.bf16.msra.mxu0 0
        %1141 = vmatprep.subr.bf16.mxu0 0
        %1142 = vmatpush1.bf16.msra.mxu0 0
        %1143 = vmatprep.mubr.bf16.mxu0 0
        %1144 = vmatmul.mubr.bf16.gmra.mrb[0].mxu0 %v1106
        %v1145 = vpop.f32.mrb[0].mxu0
        %v1146 = vadd.f32 0.0, %v1145
        %v1147 = vpop.f32.mrb[0].mxu0
        %v1148 = vpop.f32.mrb[0].mxu0
        %v1149 = vpop.f32.mrb[0].mxu0
        %1150 = vdwg.mxu0
        %v1151 = vpack.c.bf16 %v1146, %v1146
        %v1153 = vunpack.c.l.b16 %v1151
        %v1154 = vpack.c.b16 %v1153, %v1153
        %1155 = vrot.lane.b32.xlu0 %v1154, 8
        %v1156 = vpop.permute.xlu0 %1155
        %vm1158 = vcmask 126016
        %1159 = vst.msk [vmem:[#allocation4] sm:$0xf] %vm1158, %v1156
        %v1160 = vld [vmem:[#allocation2] sm:$0xf]
        %v1161 = vld [vmem:[#allocation3] sm:$0xf]
        %1162 = vrot.lane.b32.xlu0 %v918, 112
        %v1163 = vpop.permute.xlu0 %1162
        %v1165 = vunpack.c.l.b16 %v1160
        %v1166 = vpack.c.b16 %v1165, %v1165
        %1167 = vrot.lane.b32.xlu0 %v1166, 112
        %v1168 = vpop.permute.xlu0 %1167
        %v1170 = vsel %vm904, %v1163, 0
        %v1173 = vsel %vm904, %v1168, 0
        %1175 = vmatprep.subr.bf16.mxu0 0
        %1176 = vmatpush1.bf16.xpose.msra.mxu0 %v1173
        %1177 = vmatprep.subr.bf16.mxu0 0
        %1178 = vmatpush1.bf16.xpose.msra.mxu0 0
        %1179 = vmatprep.subr.bf16.mxu0 0
        %1180 = vmatpush1.bf16.xpose.msra.mxu0 0
        %1181 = vmatprep.subr.bf16.mxu0 0
        %1182 = vmatpush1.bf16.xpose.msra.mxu0 0
        %1183 = vmatprep.subr.bf16.mxu0 0
        %1184 = vmatpush1.bf16.xpose.msra.mxu0 0
        %1185 = vmatprep.subr.bf16.mxu0 0
        %1186 = vmatpush1.bf16.xpose.msra.mxu0 0
        %1187 = vmatprep.subr.bf16.mxu0 0
        %1188 = vmatpush1.bf16.xpose.msra.mxu0 0
        %1189 = vmatprep.subr.bf16.mxu0 0
        %1190 = vmatpush1.bf16.xpose.msra.mxu0 0
        %1191 = vmatprep.subr.bf16.mxu0 0
        %1192 = vmatpush1.bf16.xpose.msra.mxu0 0
        %1193 = vmatprep.subr.bf16.mxu0 0
        %1194 = vmatpush1.bf16.xpose.msra.mxu0 0
        %1195 = vmatprep.subr.bf16.mxu0 0
        %1196 = vmatpush1.bf16.xpose.msra.mxu0 0
        %1197 = vmatprep.subr.bf16.mxu0 0
        %1198 = vmatpush1.bf16.xpose.msra.mxu0 0
        %1199 = vmatprep.subr.bf16.mxu0 0
        %1200 = vmatpush1.bf16.xpose.msra.mxu0 0
        %1201 = vmatprep.subr.bf16.mxu0 0
        %1202 = vmatpush1.bf16.xpose.msra.mxu0 0
        %1203 = vmatprep.subr.bf16.mxu0 0
        %1204 = vmatpush1.bf16.xpose.msra.mxu0 0
        %1205 = vmatprep.subr.bf16.mxu0 0
        %1206 = vmatpush1.bf16.xpose.msra.mxu0 0
        %1207 = vmatprep.mubr.bf16.mxu0 0
        %1208 = vmatmul.mubr.bf16.gmra.mrb[0].mxu0 %v1170
        %v1209 = vpop.f32.mrb[0].mxu0
        %v1210 = vadd.f32 0.0, %v1209
        %v1211 = vpop.f32.mrb[0].mxu0
        %v1212 = vpop.f32.mrb[0].mxu0
        %v1213 = vpop.f32.mrb[0].mxu0
        %1214 = vdwg.mxu0
        %v1215 = vsel %vm904, %v1210, -inf
        %1216 = vmax.xlane.f32.xlu0 %v1215
        %v1217 = vpop.xlane.xlu0 %1216
        %v1218 = vsub.f32 %v1210, %v1217
        %v1219 = vmul.f32 %v1218, 1.442695
        %v1220 = vpow.pop %v1219
        %v1221 = vsel %vm904, %v1220, 0.0
        %1222 = vadd.xlane.f32.xlu0 %v1221
        %v1223 = vpop.xlane.xlu0 %1222
        %v1224 = vrcp.pop %v1223
        %v1225 = vmul.f32 %v1220, %v1224
        %s1226 = scalar_lea.vmem %s648, 16 [#allocation24]
        %1227 = vst.msk [vmem:[%s1226] sm:$0xff] %vm904, %v1225
        %v1228 = vpack.c.bf16 %v1225, %v1225
        %v1230 = vunpack.c.l.b16 %v1161
        %v1231 = vpack.c.b16 %v1230, %v1230
        %1232 = vrot.lane.b32.xlu0 %v1231, 112
        %v1233 = vpop.permute.xlu0 %1232
        %v1235 = vsel %vm904, %v1228, 0
        %v1238 = vsel %vm983, %v1233, 0
        %1240 = vmatprep.subr.bf16.mxu0 0
        %1241 = vmatpush1.bf16.msra.mxu0 %v1238
        %1242 = vmatprep.subr.bf16.mxu0 0
        %1243 = vmatpush1.bf16.msra.mxu0 0
        %1244 = vmatprep.subr.bf16.mxu0 0
        %1245 = vmatpush1.bf16.msra.mxu0 0
        %1246 = vmatprep.subr.bf16.mxu0 0
        %1247 = vmatpush1.bf16.msra.mxu0 0
        %1248 = vmatprep.subr.bf16.mxu0 0
        %1249 = vmatpush1.bf16.msra.mxu0 0
        %1250 = vmatprep.subr.bf16.mxu0 0
        %1251 = vmatpush1.bf16.msra.mxu0 0
        %1252 = vmatprep.subr.bf16.mxu0 0
        %1253 = vmatpush1.bf16.msra.mxu0 0
        %1254 = vmatprep.subr.bf16.mxu0 0
        %1255 = vmatpush1.bf16.msra.mxu0 0
        %1256 = vmatprep.subr.bf16.mxu0 0
        %1257 = vmatpush1.bf16.msra.mxu0 0
        %1258 = vmatprep.subr.bf16.mxu0 0
        %1259 = vmatpush1.bf16.msra.mxu0 0
        %1260 = vmatprep.subr.bf16.mxu0 0
        %1261 = vmatpush1.bf16.msra.mxu0 0
        %1262 = vmatprep.subr.bf16.mxu0 0
        %1263 = vmatpush1.bf16.msra.mxu0 0
        %1264 = vmatprep.subr.bf16.mxu0 0
        %1265 = vmatpush1.bf16.msra.mxu0 0
        %1266 = vmatprep.subr.bf16.mxu0 0
        %1267 = vmatpush1.bf16.msra.mxu0 0
        %1268 = vmatprep.subr.bf16.mxu0 0
        %1269 = vmatpush1.bf16.msra.mxu0 0
        %1270 = vmatprep.subr.bf16.mxu0 0
        %1271 = vmatpush1.bf16.msra.mxu0 0
        %1272 = vmatprep.mubr.bf16.mxu0 0
        %1273 = vmatmul.mubr.bf16.gmra.mrb[0].mxu0 %v1235
        %v1274 = vpop.f32.mrb[0].mxu0
        %v1275 = vadd.f32 0.0, %v1274
        %v1276 = vpop.f32.mrb[0].mxu0
        %v1277 = vpop.f32.mrb[0].mxu0
        %v1278 = vpop.f32.mrb[0].mxu0
        %1279 = vdwg.mxu0
        %v1280 = vpack.c.bf16 %v1275, %v1275
        %v1282 = vunpack.c.l.b16 %v1280
        %v1283 = vpack.c.b16 %v1282, %v1282
        %1284 = vrot.lane.b32.xlu0 %v1283, 16
        %v1285 = vpop.permute.xlu0 %1284
        %vm1287 = vcmask 191616
        %1288 = vst.msk [vmem:[#allocation4] sm:$0xf] %vm1287, %v1285
        %v1289 = vld [vmem:[#allocation2] sm:$0xf]
        %v1290 = vld [vmem:[#allocation3] sm:$0xf]
        %1291 = vrot.lane.b32.xlu0 %v918, 104
        %v1292 = vpop.permute.xlu0 %1291
        %v1294 = vunpack.c.l.b16 %v1289
        %v1295 = vpack.c.b16 %v1294, %v1294
        %1296 = vrot.lane.b32.xlu0 %v1295, 104
        %v1297 = vpop.permute.xlu0 %1296
        %v1299 = vsel %vm904, %v1292, 0
        %v1302 = vsel %vm904, %v1297, 0
        %1304 = vmatprep.subr.bf16.mxu0 0
        %1305 = vmatpush1.bf16.xpose.msra.mxu0 %v1302
        %1306 = vmatprep.subr.bf16.mxu0 0
        %1307 = vmatpush1.bf16.xpose.msra.mxu0 0
        %1308 = vmatprep.subr.bf16.mxu0 0
        %1309 = vmatpush1.bf16.xpose.msra.mxu0 0
        %1310 = vmatprep.subr.bf16.mxu0 0
        %1311 = vmatpush1.bf16.xpose.msra.mxu0 0
        %1312 = vmatprep.subr.bf16.mxu0 0
        %1313 = vmatpush1.bf16.xpose.msra.mxu0 0
        %1314 = vmatprep.subr.bf16.mxu0 0
        %1315 = vmatpush1.bf16.xpose.msra.mxu0 0
        %1316 = vmatprep.subr.bf16.mxu0 0
        %1317 = vmatpush1.bf16.xpose.msra.mxu0 0
        %1318 = vmatprep.subr.bf16.mxu0 0
        %1319 = vmatpush1.bf16.xpose.msra.mxu0 0
        %1320 = vmatprep.subr.bf16.mxu0 0
        %1321 = vmatpush1.bf16.xpose.msra.mxu0 0
        %1322 = vmatprep.subr.bf16.mxu0 0
        %1323 = vmatpush1.bf16.xpose.msra.mxu0 0
        %1324 = vmatprep.subr.bf16.mxu0 0
        %1325 = vmatpush1.bf16.xpose.msra.mxu0 0
        %1326 = vmatprep.subr.bf16.mxu0 0
        %1327 = vmatpush1.bf16.xpose.msra.mxu0 0
        %1328 = vmatprep.subr.bf16.mxu0 0
        %1329 = vmatpush1.bf16.xpose.msra.mxu0 0
        %1330 = vmatprep.subr.bf16.mxu0 0
        %1331 = vmatpush1.bf16.xpose.msra.mxu0 0
        %1332 = vmatprep.subr.bf16.mxu0 0
        %1333 = vmatpush1.bf16.xpose.msra.mxu0 0
        %1334 = vmatprep.subr.bf16.mxu0 0
        %1335 = vmatpush1.bf16.xpose.msra.mxu0 0
        %1336 = vmatprep.mubr.bf16.mxu0 0
        %1337 = vmatmul.mubr.bf16.gmra.mrb[0].mxu0 %v1299
        %v1338 = vpop.f32.mrb[0].mxu0
        %v1339 = vadd.f32 0.0, %v1338
        %v1340 = vpop.f32.mrb[0].mxu0
        %v1341 = vpop.f32.mrb[0].mxu0
        %v1342 = vpop.f32.mrb[0].mxu0
        %1343 = vdwg.mxu0
        %v1344 = vsel %vm904, %v1339, -inf
        %1345 = vmax.xlane.f32.xlu0 %v1344
        %v1346 = vpop.xlane.xlu0 %1345
        %v1347 = vsub.f32 %v1339, %v1346
        %v1348 = vmul.f32 %v1347, 1.442695
        %v1349 = vpow.pop %v1348
        %v1350 = vsel %vm904, %v1349, 0.0
        %1351 = vadd.xlane.f32.xlu0 %v1350
        %v1352 = vpop.xlane.xlu0 %1351
        %v1353 = vrcp.pop %v1352
        %v1354 = vmul.f32 %v1349, %v1353
        %s1355 = scalar_lea.vmem %s648, 24 [#allocation24]
        %1356 = vst.msk [vmem:[%s1355] sm:$0xff] %vm904, %v1354
        %v1357 = vpack.c.bf16 %v1354, %v1354
        %v1359 = vunpack.c.l.b16 %v1290
        %v1360 = vpack.c.b16 %v1359, %v1359
        %1361 = vrot.lane.b32.xlu0 %v1360, 104
        %v1362 = vpop.permute.xlu0 %1361
        %v1364 = vsel %vm904, %v1357, 0
        %v1367 = vsel %vm983, %v1362, 0
        %1369 = vmatprep.subr.bf16.mxu0 0
        %1370 = vmatpush1.bf16.msra.mxu0 %v1367
        %1371 = vmatprep.subr.bf16.mxu0 0
        %1372 = vmatpush1.bf16.msra.mxu0 0
        %1373 = vmatprep.subr.bf16.mxu0 0
        %1374 = vmatpush1.bf16.msra.mxu0 0
        %1375 = vmatprep.subr.bf16.mxu0 0
        %1376 = vmatpush1.bf16.msra.mxu0 0
        %1377 = vmatprep.subr.bf16.mxu0 0
        %1378 = vmatpush1.bf16.msra.mxu0 0
        %1379 = vmatprep.subr.bf16.mxu0 0
        %1380 = vmatpush1.bf16.msra.mxu0 0
        %1381 = vmatprep.subr.bf16.mxu0 0
        %1382 = vmatpush1.bf16.msra.mxu0 0
        %1383 = vmatprep.subr.bf16.mxu0 0
        %1384 = vmatpush1.bf16.msra.mxu0 0
        %1385 = vmatprep.subr.bf16.mxu0 0
        %1386 = vmatpush1.bf16.msra.mxu0 0
        %1387 = vmatprep.subr.bf16.mxu0 0
        %1388 = vmatpush1.bf16.msra.mxu0 0
        %1389 = vmatprep.subr.bf16.mxu0 0
        %1390 = vmatpush1.bf16.msra.mxu0 0
        %1391 = vmatprep.subr.bf16.mxu0 0
        %1392 = vmatpush1.bf16.msra.mxu0 0
        %1393 = vmatprep.subr.bf16.mxu0 0
        %1394 = vmatpush1.bf16.msra.mxu0 0
        %1395 = vmatprep.subr.bf16.mxu0 0
        %1396 = vmatpush1.bf16.msra.mxu0 0
        %1397 = vmatprep.subr.bf16.mxu0 0
        %1398 = vmatpush1.bf16.msra.mxu0 0
        %1399 = vmatprep.subr.bf16.mxu0 0
        %1400 = vmatpush1.bf16.msra.mxu0 0
        %1401 = vmatprep.mubr.bf16.mxu0 0
        %1402 = vmatmul.mubr.bf16.gmra.mrb[0].mxu0 %v1364
        %v1403 = vpop.f32.mrb[0].mxu0
        %v1404 = vadd.f32 0.0, %v1403
        %v1405 = vpop.f32.mrb[0].mxu0
        %v1406 = vpop.f32.mrb[0].mxu0
        %v1407 = vpop.f32.mrb[0].mxu0
        %1408 = vdwg.mxu0
        %v1409 = vpack.c.bf16 %v1404, %v1404
        %v1411 = vunpack.c.l.b16 %v1409
        %v1412 = vpack.c.b16 %v1411, %v1411
        %1413 = vrot.lane.b32.xlu0 %v1412, 24
        %v1414 = vpop.permute.xlu0 %1413
        %vm1416 = vcmask 257216
        %1417 = vst.msk [vmem:[#allocation4] sm:$0xf] %vm1416, %v1414
        %v1418 = vld [vmem:[#allocation4] sm:$0xf]
        %v1419 = vld [vmem:[#allocation13] sm:$0xf]
        %v1420 = vld [vmem:[#allocation13 + $0x4] sm:$0xf]
        %v1421 = vld [vmem:[#allocation13 + $0x8] sm:$0xf]
        %v1422 = vld [vmem:[#allocation13 + $0xc] sm:$0xf]
        %v1427 = vunpack.c.l.b16 %v1419
        %v1428 = vunpack.c.l.b16 %v1420
        %v1429 = vunpack.c.l.b16 %v1421
        %v1430 = vunpack.c.l.b16 %v1422
        %v1431 = vpack.c.b16 %v1428, %v1427
        %v1432 = vpack.c.b16 %v1430, %v1429
        %v1436 = vsel %vm846, %v1418, 0
        %1438 = vmatprep.subr.bf16.mxu0 0
        %1439 = vmatpush1.bf16.msra.mxu0 %v1431
        %1440 = vmatprep.subr.bf16.mxu0 0
        %1441 = vmatpush1.bf16.msra.mxu0 %v1432
        %1442 = vmatprep.subr.bf16.mxu0 0
        %1443 = vmatpush1.bf16.msra.mxu0 0
        %1444 = vmatprep.subr.bf16.mxu0 0
        %1445 = vmatpush1.bf16.msra.mxu0 0
        %1446 = vmatprep.subr.bf16.mxu0 0
        %1447 = vmatpush1.bf16.msra.mxu0 0
        %1448 = vmatprep.subr.bf16.mxu0 0
        %1449 = vmatpush1.bf16.msra.mxu0 0
        %1450 = vmatprep.subr.bf16.mxu0 0
        %1451 = vmatpush1.bf16.msra.mxu0 0
        %1452 = vmatprep.subr.bf16.mxu0 0
        %1453 = vmatpush1.bf16.msra.mxu0 0
        %1454 = vmatprep.subr.bf16.mxu0 0
        %1455 = vmatpush1.bf16.msra.mxu0 0
        %1456 = vmatprep.subr.bf16.mxu0 0
        %1457 = vmatpush1.bf16.msra.mxu0 0
        %1458 = vmatprep.subr.bf16.mxu0 0
        %1459 = vmatpush1.bf16.msra.mxu0 0
        %1460 = vmatprep.subr.bf16.mxu0 0
        %1461 = vmatpush1.bf16.msra.mxu0 0
        %1462 = vmatprep.subr.bf16.mxu0 0
        %1463 = vmatpush1.bf16.msra.mxu0 0
        %1464 = vmatprep.subr.bf16.mxu0 0
        %1465 = vmatpush1.bf16.msra.mxu0 0
        %1466 = vmatprep.subr.bf16.mxu0 0
        %1467 = vmatpush1.bf16.msra.mxu0 0
        %1468 = vmatprep.subr.bf16.mxu0 0
        %1469 = vmatpush1.bf16.msra.mxu0 0
        %1470 = vmatprep.mubr.bf16.mxu0 0
        %1471 = vmatmul.mubr.bf16.gmra.mrb[0].mxu0 %v1436
        %v1472 = vpop.f32.mrb[0].mxu0
        %v1473 = vadd.f32 0.0, %v1472
        %v1474 = vpop.f32.mrb[0].mxu0
        %v1475 = vpop.f32.mrb[0].mxu0
        %v1476 = vpop.f32.mrb[0].mxu0
        %1477 = vdwg.mxu0
        %p1478 = scmp.eq.s32.totalorder %s44, 0
        // Predicated region
        $region113: #{tpu_custom_call.1} parent=63 // pred_check
          %p1479 = pneg %p1478
        $region114: #{tpu_custom_call.1} parent=63 // pred_check_branch
          %1481 = sbr.rel (%p1479) target = $region116
        $region115: #{tpu_custom_call.1} parent=63 // pred_region
          %v1482 = vld [vmem:[#allocation19] sm:$0x1]
          %v1484 = vlaneseq
          %v1485 = vshrl.u32 %v1484, 7
          %v1486 = vsub.s32 0, %v1485
          %v1487 = vrot.slane %v1482, %v1486
          %v1489 = vadd.f32 %v1473, %v1487
          %s1490 = scalar_lea.vmem %s641, %s651 [#allocation23]
          %1491 = vst.msk [vmem:[%s1490] sm:$0xff] %vm846, %v1489
        $region116: #{tpu_custom_call.1} parent=63 // pred_fallthru
          _
        %p1492 = scmp.gt.s32.totalorder %s44, 0
        // Predicated region
        $region117: #{tpu_custom_call.1} parent=63 // pred_check
          %p1493 = pneg %p1492
        $region118: #{tpu_custom_call.1} parent=63 // pred_check_branch
          %1495 = sbr.rel (%p1493) target = $region120
        $region119: #{tpu_custom_call.1} parent=63 // pred_region
          %s1496 = scalar_lea.vmem %s641, %s651 [#allocation23]
          %v1497 = vld [vmem:[%s1496] sm:$0xff]
          %v1498 = vadd.f32 %v1497, %v1473
          %1499 = vst.msk [vmem:[%s1496] sm:$0xff] %vm846, %v1498
        $region120: #{tpu_custom_call.1} parent=63 // pred_fallthru
          _
        %s1500 = sand.u32 %s336, 1
        %s1501 = scalar_lea.sflag [#allocation7], %s1500
        %s1502 = sand.u32 %s336, 1
        %s1503 = smul.addr %s1502, 8
        %s1504 = scalar_lea.vmem [#allocation23], %s1503
        %s1505 = sand.u32 %s366, 1
        %s1506 = scalar_lea.sflag [#allocation25], %s1505
        %s1507 = sand.u32 %s366, 1
        %s1508 = smul.addr %s1507, 32
        %s1509 = scalar_lea.vmem [#allocation24], %s1508
        // Predicated region
        $region121: #{tpu_custom_call.1} parent=63 // pred_check
          %p1510 = pneg %p346
        $region122: #{tpu_custom_call.1} parent=63 // pred_check_branch
          %1512 = sbr.rel (%p1510) target = $region124
        $region123: #{tpu_custom_call.1} parent=63 // pred_region
          %s1514 = ssub.s32 128, 128
          %1515 = vsyncadd %s1501, %s1514
          %s1516 = smul.addr %s43, 128
          %s1517 = scalar_lea.hbm %s11, %s1516
          %s1519 = sshll.u32 %s1504, 4
          %s1520 = int_to_ptr.vmem [resolvable:$true] %s1519
          %1522 = dma.vmem_to_hbm [thread:$0]  %s1520, 128, %s1517, %s1501
        $region124: #{tpu_custom_call.1} parent=63 // pred_fallthru
          _
        // Predicated region
        $region125: #{tpu_custom_call.1} parent=63 // pred_check
          %p1523 = pneg %p376
        $region126: #{tpu_custom_call.1} parent=63 // pred_check_branch
          %1525 = sbr.rel (%p1523) target = $region128
        $region127: #{tpu_custom_call.1} parent=63 // pred_region
          %s1526 = smul.u32 4, %s44
          %s1528 = ssub.s32 512, 512
          %1529 = vsyncadd %s1506, %s1528
          %s1530 = sadd.s32 %s45, %s1526
          %s1531 = smul.addr %s43, 4
          %s1532 = sadd.s32 %s1530, %s1531
          %s1533 = smul.addr %s1532, 128
          %s1534 = scalar_lea.hbm %s12, %s1533
          %s1535 = sshll.u32 %s1509, 4
          %s1536 = int_to_ptr.vmem [resolvable:$true] %s1535
          %1541 = dma.vmem_to_hbm [thread:$0]  %s1536, 512, %s1534, %s1506, 128, 128, 8
        $region128: #{tpu_custom_call.1} parent=63 // pred_fallthru
          _
      $region64: #{tpu_custom_call.1} parent=5 // pred_fallthru
        _
      %p1542 = scmp.le.s32.totalorder 2, %s33
      // Predicated region
      $region129: #{tpu_custom_call.1} parent=5 // pred_check
        %p1543 = pneg %p1542
      $region130: #{tpu_custom_call.1} parent=5 // pred_check_branch
        %1545 = sbr.rel (%p1543) target = $region132
      $region131: #{tpu_custom_call.1} parent=5 // pred_region
        %s1546 = ssub.s32 %s33, 2
        // Predicated region
        $region133: #{tpu_custom_call.1} parent=131 // pred_check
          %p1547 = pneg %p352
        $region134: #{tpu_custom_call.1} parent=131 // pred_check_branch
          %1549 = sbr.rel (%p1547) target = $region136
        $region135: #{tpu_custom_call.1} parent=131 // pred_region
          %s1550 = sand.u32 %s337, 1
          %s1551 = scalar_lea.sflag [#allocation7], %s1550
          %s1552 = sand.u32 %s337, 1
          %s1553 = smul.addr %s1552, 8
          %s1554 = scalar_lea.vmem [#allocation23], %s1553
          %1555 = dma.done %s1551, 128
        $region136: #{tpu_custom_call.1} parent=131 // pred_fallthru
          _
        // Predicated region
        $region137: #{tpu_custom_call.1} parent=131 // pred_check
          %p1556 = pneg %p382
        $region138: #{tpu_custom_call.1} parent=131 // pred_check_branch
          %1558 = sbr.rel (%p1556) target = $region140
        $region139: #{tpu_custom_call.1} parent=131 // pred_region
          %s1559 = sand.u32 %s367, 1
          %s1560 = scalar_lea.sflag [#allocation25], %s1559
          %s1561 = sand.u32 %s367, 1
          %s1562 = smul.addr %s1561, 32
          %s1563 = scalar_lea.vmem [#allocation24], %s1562
          %1564 = dma.done %s1560, 512
        $region140: #{tpu_custom_call.1} parent=131 // pred_fallthru
          _
      $region132: #{tpu_custom_call.1} parent=5 // pred_fallthru
        _
    $region6: #{tpu_custom_call.1} parent=1 // loop_footer
      %s37 = sadd.s32 1, %s33
    $region7: #{tpu_custom_call.1} parent=1 // loop_footer_branch
      %32 = sbr.rel target = $region3
    $region8: #{tpu_custom_call.1} parent=1 // loop_exit
      _
    %1565 = vsyncpa [#allocation6], 1
    %s1566 = scalar_lea.sflag [#allocation6], 1
    %1567 = vsyncpa %s1566, 1
    %1568 = vsyncpa [#allocation9], 1
    %1569 = vsyncpa [#allocation12], 1
    %1570 = vsyncpa [#allocation15], 1
    %1571 = vsyncpa [#allocation18], 1
    %1572 = vsyncpa [#allocation21], 1
    %1573 = vsyncpa [#allocation7], 1
    %s1574 = scalar_lea.sflag [#allocation7], 1
    %1575 = vsyncpa %s1574, 1
    %1576 = vsyncpa [#allocation25], 1
    %s1577 = scalar_lea.sflag [#allocation25], 1
    %1578 = vsyncpa %s1577, 1

</llo_original>
